<compile_context>
chip_gen: v5e
topology: v5e:2x2
jax: 0.10.0
libtpu: 0.0.40
codegen_flags: <defaults>
</compile_context>

<pallas_src>
import jax
import jax.numpy as jnp
from jax.experimental import pallas as pl
from jax.experimental.pallas import tpu as pltpu


# ---------------------------------------------------------------------------
# Pallas kernel
# ---------------------------------------------------------------------------
def _sigmoid(x):
    # sigmoid(x) == 0.5*(tanh(x/2)+1): one EUP (tanh) push instead of exp+reciprocal.
    return 0.5 * (jnp.tanh(0.5 * x) + 1.0)


def lstm_tagger_kernel(char_emb_ref, word_emb_ref,
                       w_ih1t_ref, w_hh1t_ref, b1_ref, ch0_ref, cc0_ref,
                       w2ct_ref, w2wt_ref, w_hh2t_ref, b2_ref, h0_ref, c0_ref,
                       w_outt_ref, b_out_ref,
                       out_ref, lstm_out_scr):
    Wp = word_emb_ref.shape[0]            # padded word count (sublane multiple)
    Hc = ch0_ref.shape[1]
    H = h0_ref.shape[1]
    W = out_ref.shape[0]                  # real word count
    Lc = char_emb_ref.shape[0] // Wp      # chars per word

    # ---- char LSTM: hoisted input projection (ONE matmul for all Lc*Wp tokens) ----
    xg1 = (jnp.dot(char_emb_ref[...], w_ih1t_ref[...],
                   preferred_element_type=jnp.float32)
           + b1_ref[...])                                         # (Lc*Wp, 4Hc)
    w_hh1t = w_hh1t_ref[...]
    h = jnp.broadcast_to(ch0_ref[...], (Wp, Hc))
    c = jnp.broadcast_to(cc0_ref[...], (Wp, Hc))
    for t in range(Lc):                                           # small, static -> unroll
        gates = xg1[t * Wp:(t + 1) * Wp, :] + jnp.dot(
            h, w_hh1t, preferred_element_type=jnp.float32)        # (Wp, 4Hc)
        ifo = _sigmoid(gates[:, :3 * Hc])
        g = jnp.tanh(gates[:, 3 * Hc:])
        c = ifo[:, Hc:2 * Hc] * c + ifo[:, :Hc] * g
        h = ifo[:, 2 * Hc:3 * Hc] * jnp.tanh(c)
    char_rep = h                                                  # (Wp, Hc)  == c_hx[-1] per word

    # ---- word LSTM: input projection hoisted; concat replaced by two matmuls ----
    xg2 = (jnp.dot(char_rep, w2ct_ref[...], preferred_element_type=jnp.float32)
           + jnp.dot(word_emb_ref[...], w2wt_ref[...],
                     preferred_element_type=jnp.float32)
           + b2_ref[...])                                         # (Wp, 4H)
    w_hh2t = w_hh2t_ref[...]
    h2 = h0_ref[...]                                              # (1, H)
    c2 = c0_ref[...]
    for w in range(W):                                            # small, static -> unroll
        gates = xg2[w:w + 1, :] + jnp.dot(
            h2, w_hh2t, preferred_element_type=jnp.float32)       # (1, 4H)
        ifo = _sigmoid(gates[:, :3 * H])
        g = jnp.tanh(gates[:, 3 * H:])
        c2 = ifo[:, H:2 * H] * c2 + ifo[:, :H] * g
        h2 = ifo[:, 2 * H:3 * H] * jnp.tanh(c2)
        lstm_out_scr[pl.ds(w, 1), :] = h2                         # row store, no concat

    # ---- hidden2tag + log_softmax over tag dim ----
    tag_space = (jnp.dot(lstm_out_scr[...], w_outt_ref[...],
                         preferred_element_type=jnp.float32)
                 + b_out_ref[...])                                # (W, T)
    m = jnp.max(tag_space, axis=1, keepdims=True)
    z = tag_space - m
    lse = jnp.log(jnp.sum(jnp.exp(z), axis=1, keepdims=True))
    out_ref[...] = (z - lse).astype(out_ref.dtype)


# ---------------------------------------------------------------------------
# Wrapper (JAX glue: gathers, gate reorder, weight transposes, padding)
# ---------------------------------------------------------------------------
def _full_spec(shape):
    nd = len(shape)
    return pl.BlockSpec(shape, lambda i, _nd=nd: (0,) * _nd)


def _reorder_gates(x, axis=0):
    """PyTorch LSTM gate order [i, f, g, o] -> kernel order [i, f, o, g]."""
    i, f, g, o = jnp.split(x, 4, axis=axis)
    return jnp.concatenate([i, f, o, g], axis=axis)


def lstm_model_forward(w_seq, c_seq, params):
    """Pallas implementation of LSTMModel.forward (dropout is declared but unused)."""
    W = int(w_seq.shape[0])
    Lc = int(c_seq.shape[1])
    Hc = int(params["c_hx"].shape[-1])
    H = int(params["hx"].shape[-1])
    T = int(params["w_out"].shape[0])
    Wp = ((W + 7) // 8) * 8               # pad word axis to a sublane multiple

    # Embedding lookups (gather) stay in JAX glue; chars laid out time-major so the
    # per-timestep slice inside the kernel is a tile-aligned row block.
    char_emb = jnp.take(params["char_embedding"], c_seq, axis=0)        # (W, Lc, Ec)
    char_emb = jnp.pad(char_emb, ((0, Wp - W), (0, 0), (0, 0)))
    Ec = char_emb.shape[-1]
    char_emb2d = char_emb.transpose(1, 0, 2).reshape(Lc * Wp, Ec)       # (Lc*Wp, Ec)
    word_emb = jnp.take(params["word_embedding"], w_seq, axis=0)        # (W, Ew)
    word_emb = jnp.pad(word_emb, ((0, Wp - W), (0, 0)))                 # (Wp, Ew)

    # Gate-reorder + pre-transpose all weights in glue (no in-kernel .T).
    w_ih1t = _reorder_gates(params["w_ih1"]).T                          # (Ec, 4Hc)
    w_hh1t = _reorder_gates(params["w_hh1"]).T                          # (Hc, 4Hc)
    b1 = _reorder_gates(params["b_ih1"] + params["b_hh1"])[None, :]     # (1, 4Hc)

    w_ih2r = _reorder_gates(params["w_ih2"])                            # (4H, Hc+Ew)
    w2ct = w_ih2r[:, :Hc].T                                             # (Hc, 4H)  char block
    w2wt = w_ih2r[:, Hc:].T                                             # (Ew, 4H)  word block
    w_hh2t = _reorder_gates(params["w_hh2"]).T                          # (H, 4H)
    b2 = _reorder_gates(params["b_ih2"] + params["b_hh2"])[None, :]     # (1, 4H)

    w_outt = params["w_out"].T                                          # (H, T)
    b_out = params["b_out"][None, :]                                    # (1, T)
    ch0 = params["c_hx"].reshape(1, Hc)
    cc0 = params["c_cx"].reshape(1, Hc)
    h0 = params["hx"].reshape(1, H)
    c0 = params["cx"].reshape(1, H)

    inputs = (char_emb2d, word_emb,
              w_ih1t, w_hh1t, b1, ch0, cc0,
              w2ct, w2wt, w_hh2t, b2, h0, c0,
              w_outt, b_out)

    # TODO(synk): bf16 MXU operands (v6e/v7x) and a batch-of-sentences "parallel" grid axis
    # (second v7x TensorCore) are intentionally left out: batch=1 f32 keeps exact parity with
    # the f32 reference and this latency-bound kernel gains little from either at these shapes.
    return pl.pallas_call(
        lstm_tagger_kernel,
        out_shape=jax.ShapeDtypeStruct((W, T), jnp.float32),
        grid=(1,),
        in_specs=[_full_spec(x.shape) for x in inputs],
        out_specs=_full_spec((W, T)),
        scratch_shapes=[pltpu.VMEM((W, H), jnp.float32)],
        compiler_params=pltpu.CompilerParams(
            dimension_semantics=("arbitrary",)),
    )(*inputs)


# ---------------------------------------------------------------------------
# Pure-JAX reference (original PyTorch gate order / math) for correctness check.
# ---------------------------------------------------------------------------
def _lstm_cell_ref(x, h, c, w_ih, w_hh, b, H):
    gates = x @ w_ih.T + h @ w_hh.T + b
    i = jax.nn.sigmoid(gates[:, 0 * H:1 * H])
    f = jax.nn.sigmoid(gates[:, 1 * H:2 * H])
    g = jnp.tanh(gates[:, 2 * H:3 * H])
    o = jax.nn.sigmoid(gates[:, 3 * H:4 * H])
    c_new = f * c + i * g
    h_new = o * jnp.tanh(c_new)
    return h_new, c_new


def lstm_model_forward_ref(w_seq, c_seq, params):
    char_emb = jnp.take(params["char_embedding"], c_seq, axis=0)
    word_emb = jnp.take(params["word_embedding"], w_seq, axis=0)
    Hc = params["c_hx"].shape[-1]
    H = params["hx"].shape[-1]
    b1 = params["b_ih1"] + params["b_hh1"]
    b2 = params["b_ih2"] + params["b_hh2"]

    W = w_seq.shape[0]
    h = jnp.broadcast_to(params["c_hx"].reshape(1, Hc), (W, Hc))
    c = jnp.broadcast_to(params["c_cx"].reshape(1, Hc), (W, Hc))
    for t in range(c_seq.shape[1]):
        h, c = _lstm_cell_ref(char_emb[:, t, :], h, c,
                              params["w_ih1"], params["w_hh1"], b1[None, :], Hc)
    x_seq = jnp.concatenate([h, word_emb], axis=1)

    h2 = params["hx"].reshape(1, H)
    c2 = params["cx"].reshape(1, H)
    outs = []
    for w in range(W):
        h2, c2 = _lstm_cell_ref(x_seq[w:w + 1], h2, c2,
                                params["w_ih2"], params["w_hh2"], b2[None, :], H)
        outs.append(h2)
    lstm_out = jnp.concatenate(outs, axis=0)
    tag_space = lstm_out @ params["w_out"].T + params["b_out"][None, :]
    return jax.nn.log_softmax(tag_space, axis=1)


# ---------------------------------------------------------------------------
# Deterministic parameter init + demo
# ---------------------------------------------------------------------------
def init_params(key, vocab_size, charset_size, tagset_size,
                c_embedding_dim, c_hidden_dim, w_embedding_dim, hidden_dim):
    ks = jax.random.split(key, 12)
    D2 = w_embedding_dim + c_hidden_dim
    u = lambda k, shape, s: jax.random.uniform(k, shape, jnp.float32, -s, s)
    return {
        "char_embedding": jax.random.normal(ks[0], (charset_size, c_embedding_dim), jnp.float32),
        "word_embedding": jax.random.normal(ks[1], (vocab_size, w_embedding_dim), jnp.float32),
        # lstm1 (PyTorch layout, gate order i,f,g,o)
        "w_ih1": u(ks[2], (4 * c_hidden_dim, c_embedding_dim), 0.25),
        "w_hh1": u(ks[3], (4 * c_hidden_dim, c_hidden_dim), 0.25),
        "b_ih1": u(ks[4], (4 * c_hidden_dim,), 0.25),
        "b_hh1": u(ks[5], (4 * c_hidden_dim,), 0.25),
        "c_hx": jnp.zeros((1, 1, c_hidden_dim), jnp.float32),
        "c_cx": jnp.zeros((1, 1, c_hidden_dim), jnp.float32),
        # lstm2
        "w_ih2": u(ks[6], (4 * hidden_dim, D2), 0.18),
        "w_hh2": u(ks[7], (4 * hidden_dim, hidden_dim), 0.18),
        "b_ih2": u(ks[8], (4 * hidden_dim,), 0.18),
        "b_hh2": u(ks[9], (4 * hidden_dim,), 0.18),
        "hx": jnp.zeros((1, 1, hidden_dim), jnp.float32),
        "cx": jnp.zeros((1, 1, hidden_dim), jnp.float32),
        # hidden2tag
        "w_out": u(ks[10], (tagset_size, hidden_dim), 0.18),
        "b_out": u(ks[11], (tagset_size,), 0.18),
        # TODO(synk): nn.Dropout is declared but never applied in forward(); omitted.
    }


if __name__ == "__main__":
    vocab_size, charset_size, tagset_size = 20, 30, 6
    c_embedding_dim, c_hidden_dim = 8, 16
    w_embedding_dim, hidden_dim = 16, 32
    W, Lc = 6, 5  # words per sentence, chars per word (fixed length)

    key = jax.random.PRNGKey(0)
    kp, kw, kc = jax.random.split(key, 3)
    params = init_params(kp, vocab_size, charset_size, tagset_size,
                         c_embedding_dim, c_hidden_dim, w_embedding_dim, hidden_dim)

    w_seq = jax.random.randint(kw, (W,), 0, vocab_size, jnp.int32)
    c_seq = jax.random.randint(kc, (W, Lc), 0, charset_size, jnp.int32)

    tag_score = jax.block_until_ready(lstm_model_forward(w_seq, c_seq, params))
    tag_score_ref = jax.block_until_ready(lstm_model_forward_ref(w_seq, c_seq, params))

    assert tag_score.shape == (W, tagset_size)
    assert bool(jnp.all(jnp.isfinite(tag_score)))
    assert bool(jnp.allclose(tag_score, tag_score_ref, atol=1e-4, rtol=1e-4)), (
        "Pallas output does not match JAX reference")

    print("KERNEL_OK")
</pallas_src>

<mosaic_0001>
module attributes {stable_mosaic.version = 11 : i64} {
  func.func @lstm_tagger_kernel(%arg0: i32, %arg1: memref<40x8xf32, #tpu.memory_space<vmem>>, %arg2: memref<8x16xf32, #tpu.memory_space<vmem>>, %arg3: memref<8x64xf32, #tpu.memory_space<vmem>>, %arg4: memref<16x64xf32, #tpu.memory_space<vmem>>, %arg5: memref<1x64xf32, #tpu.memory_space<vmem>>, %arg6: memref<1x16xf32, #tpu.memory_space<vmem>>, %arg7: memref<1x16xf32, #tpu.memory_space<vmem>>, %arg8: memref<16x128xf32, #tpu.memory_space<vmem>>, %arg9: memref<16x128xf32, #tpu.memory_space<vmem>>, %arg10: memref<32x128xf32, #tpu.memory_space<vmem>>, %arg11: memref<1x128xf32, #tpu.memory_space<vmem>>, %arg12: memref<1x32xf32, #tpu.memory_space<vmem>>, %arg13: memref<1x32xf32, #tpu.memory_space<vmem>>, %arg14: memref<32x6xf32, #tpu.memory_space<vmem>>, %arg15: memref<1x6xf32, #tpu.memory_space<vmem>>, %arg16: memref<6x6xf32, #tpu.memory_space<vmem>>, %arg17: memref<6x32xf32, #tpu.memory_space<vmem>>) attributes {dimension_semantics = [#tpu.dimension_semantics<arbitrary>], iteration_bounds = array<i64: 1>, scalar_prefetch = 0 : i64, scratch_operands = 1 : i64, tpu.core_type = #tpu.core_type<tc>, window_params = [{pipeline_mode = #tpu.pipeline_mode<synchronous>, transform_indices = @transform_0, window_bounds = array<i64: 40, 8>}, {pipeline_mode = #tpu.pipeline_mode<synchronous>, transform_indices = @transform_1, window_bounds = array<i64: 8, 16>}, {pipeline_mode = #tpu.pipeline_mode<synchronous>, transform_indices = @transform_2, window_bounds = array<i64: 8, 64>}, {pipeline_mode = #tpu.pipeline_mode<synchronous>, transform_indices = @transform_3, window_bounds = array<i64: 16, 64>}, {pipeline_mode = #tpu.pipeline_mode<synchronous>, transform_indices = @transform_4, window_bounds = array<i64: 1, 64>}, {pipeline_mode = #tpu.pipeline_mode<synchronous>, transform_indices = @transform_5, window_bounds = array<i64: 1, 16>}, {pipeline_mode = #tpu.pipeline_mode<synchronous>, transform_indices = @transform_6, window_bounds = array<i64: 1, 16>}, {pipeline_mode = #tpu.pipeline_mode<synchronous>, transform_indices = @transform_7, window_bounds = array<i64: 16, 128>}, {pipeline_mode = #tpu.pipeline_mode<synchronous>, transform_indices = @transform_8, window_bounds = array<i64: 16, 128>}, {pipeline_mode = #tpu.pipeline_mode<synchronous>, transform_indices = @transform_9, window_bounds = array<i64: 32, 128>}, {pipeline_mode = #tpu.pipeline_mode<synchronous>, transform_indices = @transform_10, window_bounds = array<i64: 1, 128>}, {pipeline_mode = #tpu.pipeline_mode<synchronous>, transform_indices = @transform_11, window_bounds = array<i64: 1, 32>}, {pipeline_mode = #tpu.pipeline_mode<synchronous>, transform_indices = @transform_12, window_bounds = array<i64: 1, 32>}, {pipeline_mode = #tpu.pipeline_mode<synchronous>, transform_indices = @transform_13, window_bounds = array<i64: 32, 6>}, {pipeline_mode = #tpu.pipeline_mode<synchronous>, transform_indices = @transform_14, window_bounds = array<i64: 1, 6>}, {pipeline_mode = #tpu.pipeline_mode<synchronous>, transform_indices = @transform_15, window_bounds = array<i64: 6, 6>}]} {
    %c0 = arith.constant 0 : index
    %c0_0 = arith.constant 0 : index
    %0 = vector.load %arg1[%c0, %c0_0] : memref<40x8xf32, #tpu.memory_space<vmem>>, vector<40x8xf32>
    %c0_1 = arith.constant 0 : index
    %c0_2 = arith.constant 0 : index
    %1 = vector.load %arg3[%c0_1, %c0_2] : memref<8x64xf32, #tpu.memory_space<vmem>>, vector<8x64xf32>
    %cst = arith.constant dense<0.000000e+00> : vector<40x64xf32>
    %2 = tpu.matmul %0, %1, %cst {dimension_numbers = #tpu.dot_dimension_numbers<[1], [0], [0], [1], [0, 0, 1, 1], [], []>} : vector<40x8xf32>, vector<8x64xf32>, vector<40x64xf32> -> vector<40x64xf32>
    %c0_3 = arith.constant 0 : index
    %c0_4 = arith.constant 0 : index
    %3 = vector.load %arg5[%c0_3, %c0_4] : memref<1x64xf32, #tpu.memory_space<vmem>>, vector<1x64xf32>
    %4 = vector.broadcast %3 : vector<1x64xf32> to vector<40x64xf32>
    %5 = arith.addf %2, %4 : vector<40x64xf32>
    %c0_5 = arith.constant 0 : index
    %c0_6 = arith.constant 0 : index
    %6 = vector.load %arg4[%c0_5, %c0_6] : memref<16x64xf32, #tpu.memory_space<vmem>>, vector<16x64xf32>
    %c0_7 = arith.constant 0 : index
    %c0_8 = arith.constant 0 : index
    %7 = vector.load %arg6[%c0_7, %c0_8] : memref<1x16xf32, #tpu.memory_space<vmem>>, vector<1x16xf32>
    %8 = vector.shape_cast %7 : vector<1x16xf32> to vector<1x16xf32>
    %9 = vector.broadcast %8 : vector<1x16xf32> to vector<8x16xf32>
    %c0_9 = arith.constant 0 : index
    %c0_10 = arith.constant 0 : index
    %10 = vector.load %arg7[%c0_9, %c0_10] : memref<1x16xf32, #tpu.memory_space<vmem>>, vector<1x16xf32>
    %11 = vector.shape_cast %10 : vector<1x16xf32> to vector<1x16xf32>
    %12 = vector.broadcast %11 : vector<1x16xf32> to vector<8x16xf32>
    %13 = vector.extract_strided_slice %5 {offsets = [0, 0], sizes = [8, 64], strides = [1, 1]} : vector<40x64xf32> to vector<8x64xf32>
    %cst_11 = arith.constant dense<0.000000e+00> : vector<8x64xf32>
    %14 = tpu.matmul %9, %6, %cst_11 {dimension_numbers = #tpu.dot_dimension_numbers<[1], [0], [0], [1], [0, 0, 1, 1], [], []>} : vector<8x16xf32>, vector<16x64xf32>, vector<8x64xf32> -> vector<8x64xf32>
    %15 = arith.addf %13, %14 : vector<8x64xf32>
    %16 = vector.extract_strided_slice %15 {offsets = [0, 0], sizes = [8, 48], strides = [1, 1]} : vector<8x64xf32> to vector<8x48xf32>
    %cst_12 = arith.constant 5.000000e-01 : f32
    %17 = vector.broadcast %cst_12 : f32 to vector<8x48xf32>
    %18 = arith.mulf %17, %16 : vector<8x48xf32>
    %19 = math.tanh %18 : vector<8x48xf32>
    %cst_13 = arith.constant 1.000000e+00 : f32
    %20 = vector.broadcast %cst_13 : f32 to vector<8x48xf32>
    %21 = arith.addf %19, %20 : vector<8x48xf32>
    %cst_14 = arith.constant 5.000000e-01 : f32
    %22 = vector.broadcast %cst_14 : f32 to vector<8x48xf32>
    %23 = arith.mulf %22, %21 : vector<8x48xf32>
    %24 = vector.extract_strided_slice %15 {offsets = [0, 48], sizes = [8, 16], strides = [1, 1]} : vector<8x64xf32> to vector<8x16xf32>
    %25 = math.tanh %24 : vector<8x16xf32>
    %26 = vector.extract_strided_slice %23 {offsets = [0, 16], sizes = [8, 16], strides = [1, 1]} : vector<8x48xf32> to vector<8x16xf32>
    %27 = arith.mulf %26, %12 : vector<8x16xf32>
    %28 = vector.extract_strided_slice %23 {offsets = [0, 0], sizes = [8, 16], strides = [1, 1]} : vector<8x48xf32> to vector<8x16xf32>
    %29 = arith.mulf %28, %25 : vector<8x16xf32>
    %30 = arith.addf %27, %29 : vector<8x16xf32>
    %31 = vector.extract_strided_slice %23 {offsets = [0, 32], sizes = [8, 16], strides = [1, 1]} : vector<8x48xf32> to vector<8x16xf32>
    %32 = math.tanh %30 : vector<8x16xf32>
    %33 = arith.mulf %31, %32 : vector<8x16xf32>
    %34 = vector.extract_strided_slice %5 {offsets = [8, 0], sizes = [8, 64], strides = [1, 1]} : vector<40x64xf32> to vector<8x64xf32>
    %cst_15 = arith.constant dense<0.000000e+00> : vector<8x64xf32>
    %35 = tpu.matmul %33, %6, %cst_15 {dimension_numbers = #tpu.dot_dimension_numbers<[1], [0], [0], [1], [0, 0, 1, 1], [], []>} : vector<8x16xf32>, vector<16x64xf32>, vector<8x64xf32> -> vector<8x64xf32>
    %36 = arith.addf %34, %35 : vector<8x64xf32>
    %37 = vector.extract_strided_slice %36 {offsets = [0, 0], sizes = [8, 48], strides = [1, 1]} : vector<8x64xf32> to vector<8x48xf32>
    %cst_16 = arith.constant 5.000000e-01 : f32
    %38 = vector.broadcast %cst_16 : f32 to vector<8x48xf32>
    %39 = arith.mulf %38, %37 : vector<8x48xf32>
    %40 = math.tanh %39 : vector<8x48xf32>
    %cst_17 = arith.constant 1.000000e+00 : f32
    %41 = vector.broadcast %cst_17 : f32 to vector<8x48xf32>
    %42 = arith.addf %40, %41 : vector<8x48xf32>
    %cst_18 = arith.constant 5.000000e-01 : f32
    %43 = vector.broadcast %cst_18 : f32 to vector<8x48xf32>
    %44 = arith.mulf %43, %42 : vector<8x48xf32>
    %45 = vector.extract_strided_slice %36 {offsets = [0, 48], sizes = [8, 16], strides = [1, 1]} : vector<8x64xf32> to vector<8x16xf32>
    %46 = math.tanh %45 : vector<8x16xf32>
    %47 = vector.extract_strided_slice %44 {offsets = [0, 16], sizes = [8, 16], strides = [1, 1]} : vector<8x48xf32> to vector<8x16xf32>
    %48 = arith.mulf %47, %30 : vector<8x16xf32>
    %49 = vector.extract_strided_slice %44 {offsets = [0, 0], sizes = [8, 16], strides = [1, 1]} : vector<8x48xf32> to vector<8x16xf32>
    %50 = arith.mulf %49, %46 : vector<8x16xf32>
    %51 = arith.addf %48, %50 : vector<8x16xf32>
    %52 = vector.extract_strided_slice %44 {offsets = [0, 32], sizes = [8, 16], strides = [1, 1]} : vector<8x48xf32> to vector<8x16xf32>
    %53 = math.tanh %51 : vector<8x16xf32>
    %54 = arith.mulf %52, %53 : vector<8x16xf32>
    %55 = vector.extract_strided_slice %5 {offsets = [16, 0], sizes = [8, 64], strides = [1, 1]} : vector<40x64xf32> to vector<8x64xf32>
    %cst_19 = arith.constant dense<0.000000e+00> : vector<8x64xf32>
    %56 = tpu.matmul %54, %6, %cst_19 {dimension_numbers = #tpu.dot_dimension_numbers<[1], [0], [0], [1], [0, 0, 1, 1], [], []>} : vector<8x16xf32>, vector<16x64xf32>, vector<8x64xf32> -> vector<8x64xf32>
    %57 = arith.addf %55, %56 : vector<8x64xf32>
    %58 = vector.extract_strided_slice %57 {offsets = [0, 0], sizes = [8, 48], strides = [1, 1]} : vector<8x64xf32> to vector<8x48xf32>
    %cst_20 = arith.constant 5.000000e-01 : f32
    %59 = vector.broadcast %cst_20 : f32 to vector<8x48xf32>
    %60 = arith.mulf %59, %58 : vector<8x48xf32>
    %61 = math.tanh %60 : vector<8x48xf32>
    %cst_21 = arith.constant 1.000000e+00 : f32
    %62 = vector.broadcast %cst_21 : f32 to vector<8x48xf32>
    %63 = arith.addf %61, %62 : vector<8x48xf32>
    %cst_22 = arith.constant 5.000000e-01 : f32
    %64 = vector.broadcast %cst_22 : f32 to vector<8x48xf32>
    %65 = arith.mulf %64, %63 : vector<8x48xf32>
    %66 = vector.extract_strided_slice %57 {offsets = [0, 48], sizes = [8, 16], strides = [1, 1]} : vector<8x64xf32> to vector<8x16xf32>
    %67 = math.tanh %66 : vector<8x16xf32>
    %68 = vector.extract_strided_slice %65 {offsets = [0, 16], sizes = [8, 16], strides = [1, 1]} : vector<8x48xf32> to vector<8x16xf32>
    %69 = arith.mulf %68, %51 : vector<8x16xf32>
    %70 = vector.extract_strided_slice %65 {offsets = [0, 0], sizes = [8, 16], strides = [1, 1]} : vector<8x48xf32> to vector<8x16xf32>
    %71 = arith.mulf %70, %67 : vector<8x16xf32>
    %72 = arith.addf %69, %71 : vector<8x16xf32>
    %73 = vector.extract_strided_slice %65 {offsets = [0, 32], sizes = [8, 16], strides = [1, 1]} : vector<8x48xf32> to vector<8x16xf32>
    %74 = math.tanh %72 : vector<8x16xf32>
    %75 = arith.mulf %73, %74 : vector<8x16xf32>
    %76 = vector.extract_strided_slice %5 {offsets = [24, 0], sizes = [8, 64], strides = [1, 1]} : vector<40x64xf32> to vector<8x64xf32>
    %cst_23 = arith.constant dense<0.000000e+00> : vector<8x64xf32>
    %77 = tpu.matmul %75, %6, %cst_23 {dimension_numbers = #tpu.dot_dimension_numbers<[1], [0], [0], [1], [0, 0, 1, 1], [], []>} : vector<8x16xf32>, vector<16x64xf32>, vector<8x64xf32> -> vector<8x64xf32>
    %78 = arith.addf %76, %77 : vector<8x64xf32>
    %79 = vector.extract_strided_slice %78 {offsets = [0, 0], sizes = [8, 48], strides = [1, 1]} : vector<8x64xf32> to vector<8x48xf32>
    %cst_24 = arith.constant 5.000000e-01 : f32
    %80 = vector.broadcast %cst_24 : f32 to vector<8x48xf32>
    %81 = arith.mulf %80, %79 : vector<8x48xf32>
    %82 = math.tanh %81 : vector<8x48xf32>
    %cst_25 = arith.constant 1.000000e+00 : f32
    %83 = vector.broadcast %cst_25 : f32 to vector<8x48xf32>
    %84 = arith.addf %82, %83 : vector<8x48xf32>
    %cst_26 = arith.constant 5.000000e-01 : f32
    %85 = vector.broadcast %cst_26 : f32 to vector<8x48xf32>
    %86 = arith.mulf %85, %84 : vector<8x48xf32>
    %87 = vector.extract_strided_slice %78 {offsets = [0, 48], sizes = [8, 16], strides = [1, 1]} : vector<8x64xf32> to vector<8x16xf32>
    %88 = math.tanh %87 : vector<8x16xf32>
    %89 = vector.extract_strided_slice %86 {offsets = [0, 16], sizes = [8, 16], strides = [1, 1]} : vector<8x48xf32> to vector<8x16xf32>
    %90 = arith.mulf %89, %72 : vector<8x16xf32>
    %91 = vector.extract_strided_slice %86 {offsets = [0, 0], sizes = [8, 16], strides = [1, 1]} : vector<8x48xf32> to vector<8x16xf32>
    %92 = arith.mulf %91, %88 : vector<8x16xf32>
    %93 = arith.addf %90, %92 : vector<8x16xf32>
    %94 = vector.extract_strided_slice %86 {offsets = [0, 32], sizes = [8, 16], strides = [1, 1]} : vector<8x48xf32> to vector<8x16xf32>
    %95 = math.tanh %93 : vector<8x16xf32>
    %96 = arith.mulf %94, %95 : vector<8x16xf32>
    %97 = vector.extract_strided_slice %5 {offsets = [32, 0], sizes = [8, 64], strides = [1, 1]} : vector<40x64xf32> to vector<8x64xf32>
    %cst_27 = arith.constant dense<0.000000e+00> : vector<8x64xf32>
    %98 = tpu.matmul %96, %6, %cst_27 {dimension_numbers = #tpu.dot_dimension_numbers<[1], [0], [0], [1], [0, 0, 1, 1], [], []>} : vector<8x16xf32>, vector<16x64xf32>, vector<8x64xf32> -> vector<8x64xf32>
    %99 = arith.addf %97, %98 : vector<8x64xf32>
    %100 = vector.extract_strided_slice %99 {offsets = [0, 0], sizes = [8, 48], strides = [1, 1]} : vector<8x64xf32> to vector<8x48xf32>
    %cst_28 = arith.constant 5.000000e-01 : f32
    %101 = vector.broadcast %cst_28 : f32 to vector<8x48xf32>
    %102 = arith.mulf %101, %100 : vector<8x48xf32>
    %103 = math.tanh %102 : vector<8x48xf32>
    %cst_29 = arith.constant 1.000000e+00 : f32
    %104 = vector.broadcast %cst_29 : f32 to vector<8x48xf32>
    %105 = arith.addf %103, %104 : vector<8x48xf32>
    %cst_30 = arith.constant 5.000000e-01 : f32
    %106 = vector.broadcast %cst_30 : f32 to vector<8x48xf32>
    %107 = arith.mulf %106, %105 : vector<8x48xf32>
    %108 = vector.extract_strided_slice %99 {offsets = [0, 48], sizes = [8, 16], strides = [1, 1]} : vector<8x64xf32> to vector<8x16xf32>
    %109 = math.tanh %108 : vector<8x16xf32>
    %110 = vector.extract_strided_slice %107 {offsets = [0, 16], sizes = [8, 16], strides = [1, 1]} : vector<8x48xf32> to vector<8x16xf32>
    %111 = arith.mulf %110, %93 : vector<8x16xf32>
    %112 = vector.extract_strided_slice %107 {offsets = [0, 0], sizes = [8, 16], strides = [1, 1]} : vector<8x48xf32> to vector<8x16xf32>
    %113 = arith.mulf %112, %109 : vector<8x16xf32>
    %114 = arith.addf %111, %113 : vector<8x16xf32>
    %115 = vector.extract_strided_slice %107 {offsets = [0, 32], sizes = [8, 16], strides = [1, 1]} : vector<8x48xf32> to vector<8x16xf32>
    %116 = math.tanh %114 : vector<8x16xf32>
    %117 = arith.mulf %115, %116 : vector<8x16xf32>
    %c0_31 = arith.constant 0 : index
    %c0_32 = arith.constant 0 : index
    %118 = vector.load %arg8[%c0_31, %c0_32] : memref<16x128xf32, #tpu.memory_space<vmem>>, vector<16x128xf32>
    %cst_33 = arith.constant dense<0.000000e+00> : vector<8x128xf32>
    %119 = tpu.matmul %117, %118, %cst_33 {dimension_numbers = #tpu.dot_dimension_numbers<[1], [0], [0], [1], [0, 0, 1, 1], [], []>} : vector<8x16xf32>, vector<16x128xf32>, vector<8x128xf32> -> vector<8x128xf32>
    %c0_34 = arith.constant 0 : index
    %c0_35 = arith.constant 0 : index
    %120 = vector.load %arg2[%c0_34, %c0_35] : memref<8x16xf32, #tpu.memory_space<vmem>>, vector<8x16xf32>
    %c0_36 = arith.constant 0 : index
    %c0_37 = arith.constant 0 : index
    %121 = vector.load %arg9[%c0_36, %c0_37] : memref<16x128xf32, #tpu.memory_space<vmem>>, vector<16x128xf32>
    %cst_38 = arith.constant dense<0.000000e+00> : vector<8x128xf32>
    %122 = tpu.matmul %120, %121, %cst_38 {dimension_numbers = #tpu.dot_dimension_numbers<[1], [0], [0], [1], [0, 0, 1, 1], [], []>} : vector<8x16xf32>, vector<16x128xf32>, vector<8x128xf32> -> vector<8x128xf32>
    %123 = arith.addf %119, %122 : vector<8x128xf32>
    %c0_39 = arith.constant 0 : index
    %c0_40 = arith.constant 0 : index
    %124 = vector.load %arg11[%c0_39, %c0_40] : memref<1x128xf32, #tpu.memory_space<vmem>>, vector<1x128xf32>
    %125 = vector.broadcast %124 : vector<1x128xf32> to vector<8x128xf32>
    %126 = arith.addf %123, %125 : vector<8x128xf32>
    %c0_41 = arith.constant 0 : index
    %c0_42 = arith.constant 0 : index
    %127 = vector.load %arg10[%c0_41, %c0_42] : memref<32x128xf32, #tpu.memory_space<vmem>>, vector<32x128xf32>
    %c0_43 = arith.constant 0 : index
    %c0_44 = arith.constant 0 : index
    %128 = vector.load %arg12[%c0_43, %c0_44] : memref<1x32xf32, #tpu.memory_space<vmem>>, vector<1x32xf32>
    %c0_45 = arith.constant 0 : index
    %c0_46 = arith.constant 0 : index
    %129 = vector.load %arg13[%c0_45, %c0_46] : memref<1x32xf32, #tpu.memory_space<vmem>>, vector<1x32xf32>
    %130 = vector.extract_strided_slice %126 {offsets = [0, 0], sizes = [1, 128], strides = [1, 1]} : vector<8x128xf32> to vector<1x128xf32>
    %cst_47 = arith.constant dense<0.000000e+00> : vector<1x128xf32>
    %131 = tpu.matmul %128, %127, %cst_47 {dimension_numbers = #tpu.dot_dimension_numbers<[1], [0], [0], [1], [0, 0, 1, 1], [], []>} : vector<1x32xf32>, vector<32x128xf32>, vector<1x128xf32> -> vector<1x128xf32>
    %132 = arith.addf %130, %131 : vector<1x128xf32>
    %133 = vector.extract_strided_slice %132 {offsets = [0, 0], sizes = [1, 96], strides = [1, 1]} : vector<1x128xf32> to vector<1x96xf32>
    %cst_48 = arith.constant 5.000000e-01 : f32
    %134 = vector.broadcast %cst_48 : f32 to vector<1x96xf32>
    %135 = arith.mulf %134, %133 : vector<1x96xf32>
    %136 = math.tanh %135 : vector<1x96xf32>
    %cst_49 = arith.constant 1.000000e+00 : f32
    %137 = vector.broadcast %cst_49 : f32 to vector<1x96xf32>
    %138 = arith.addf %136, %137 : vector<1x96xf32>
    %cst_50 = arith.constant 5.000000e-01 : f32
    %139 = vector.broadcast %cst_50 : f32 to vector<1x96xf32>
    %140 = arith.mulf %139, %138 : vector<1x96xf32>
    %141 = vector.extract_strided_slice %132 {offsets = [0, 96], sizes = [1, 32], strides = [1, 1]} : vector<1x128xf32> to vector<1x32xf32>
    %142 = math.tanh %141 : vector<1x32xf32>
    %143 = vector.extract_strided_slice %140 {offsets = [0, 32], sizes = [1, 32], strides = [1, 1]} : vector<1x96xf32> to vector<1x32xf32>
    %144 = arith.mulf %143, %129 : vector<1x32xf32>
    %145 = vector.extract_strided_slice %140 {offsets = [0, 0], sizes = [1, 32], strides = [1, 1]} : vector<1x96xf32> to vector<1x32xf32>
    %146 = arith.mulf %145, %142 : vector<1x32xf32>
    %147 = arith.addf %144, %146 : vector<1x32xf32>
    %148 = vector.extract_strided_slice %140 {offsets = [0, 64], sizes = [1, 32], strides = [1, 1]} : vector<1x96xf32> to vector<1x32xf32>
    %149 = math.tanh %147 : vector<1x32xf32>
    %150 = arith.mulf %148, %149 : vector<1x32xf32>
    %c0_51 = arith.constant 0 : index
    %c0_52 = arith.constant 0 : index
    %151 = vector.load %arg17[%c0_51, %c0_52] : memref<6x32xf32, #tpu.memory_space<vmem>>, vector<1x32xf32>
    tpu.vector_store %arg17[%c0_51, %c0_52], %150 {strides = array<i32>} : memref<6x32xf32, #tpu.memory_space<vmem>>, vector<1x32xf32>,
    %152 = vector.extract_strided_slice %126 {offsets = [1, 0], sizes = [1, 128], strides = [1, 1]} : vector<8x128xf32> to vector<1x128xf32>
    %cst_53 = arith.constant dense<0.000000e+00> : vector<1x128xf32>
    %153 = tpu.matmul %150, %127, %cst_53 {dimension_numbers = #tpu.dot_dimension_numbers<[1], [0], [0], [1], [0, 0, 1, 1], [], []>} : vector<1x32xf32>, vector<32x128xf32>, vector<1x128xf32> -> vector<1x128xf32>
    %154 = arith.addf %152, %153 : vector<1x128xf32>
    %155 = vector.extract_strided_slice %154 {offsets = [0, 0], sizes = [1, 96], strides = [1, 1]} : vector<1x128xf32> to vector<1x96xf32>
    %cst_54 = arith.constant 5.000000e-01 : f32
    %156 = vector.broadcast %cst_54 : f32 to vector<1x96xf32>
    %157 = arith.mulf %156, %155 : vector<1x96xf32>
    %158 = math.tanh %157 : vector<1x96xf32>
    %cst_55 = arith.constant 1.000000e+00 : f32
    %159 = vector.broadcast %cst_55 : f32 to vector<1x96xf32>
    %160 = arith.addf %158, %159 : vector<1x96xf32>
    %cst_56 = arith.constant 5.000000e-01 : f32
    %161 = vector.broadcast %cst_56 : f32 to vector<1x96xf32>
    %162 = arith.mulf %161, %160 : vector<1x96xf32>
    %163 = vector.extract_strided_slice %154 {offsets = [0, 96], sizes = [1, 32], strides = [1, 1]} : vector<1x128xf32> to vector<1x32xf32>
    %164 = math.tanh %163 : vector<1x32xf32>
    %165 = vector.extract_strided_slice %162 {offsets = [0, 32], sizes = [1, 32], strides = [1, 1]} : vector<1x96xf32> to vector<1x32xf32>
    %166 = arith.mulf %165, %147 : vector<1x32xf32>
    %167 = vector.extract_strided_slice %162 {offsets = [0, 0], sizes = [1, 32], strides = [1, 1]} : vector<1x96xf32> to vector<1x32xf32>
    %168 = arith.mulf %167, %164 : vector<1x32xf32>
    %169 = arith.addf %166, %168 : vector<1x32xf32>
    %170 = vector.extract_strided_slice %162 {offsets = [0, 64], sizes = [1, 32], strides = [1, 1]} : vector<1x96xf32> to vector<1x32xf32>
    %171 = math.tanh %169 : vector<1x32xf32>
    %172 = arith.mulf %170, %171 : vector<1x32xf32>
    %c1 = arith.constant 1 : index
    %c0_57 = arith.constant 0 : index
    %173 = vector.load %arg17[%c1, %c0_57] : memref<6x32xf32, #tpu.memory_space<vmem>>, vector<1x32xf32>
    tpu.vector_store %arg17[%c1, %c0_57], %172 {strides = array<i32>} : memref<6x32xf32, #tpu.memory_space<vmem>>, vector<1x32xf32>,
    %174 = vector.extract_strided_slice %126 {offsets = [2, 0], sizes = [1, 128], strides = [1, 1]} : vector<8x128xf32> to vector<1x128xf32>
    %cst_58 = arith.constant dense<0.000000e+00> : vector<1x128xf32>
    %175 = tpu.matmul %172, %127, %cst_58 {dimension_numbers = #tpu.dot_dimension_numbers<[1], [0], [0], [1], [0, 0, 1, 1], [], []>} : vector<1x32xf32>, vector<32x128xf32>, vector<1x128xf32> -> vector<1x128xf32>
    %176 = arith.addf %174, %175 : vector<1x128xf32>
    %177 = vector.extract_strided_slice %176 {offsets = [0, 0], sizes = [1, 96], strides = [1, 1]} : vector<1x128xf32> to vector<1x96xf32>
    %cst_59 = arith.constant 5.000000e-01 : f32
    %178 = vector.broadcast %cst_59 : f32 to vector<1x96xf32>
    %179 = arith.mulf %178, %177 : vector<1x96xf32>
    %180 = math.tanh %179 : vector<1x96xf32>
    %cst_60 = arith.constant 1.000000e+00 : f32
    %181 = vector.broadcast %cst_60 : f32 to vector<1x96xf32>
    %182 = arith.addf %180, %181 : vector<1x96xf32>
    %cst_61 = arith.constant 5.000000e-01 : f32
    %183 = vector.broadcast %cst_61 : f32 to vector<1x96xf32>
    %184 = arith.mulf %183, %182 : vector<1x96xf32>
    %185 = vector.extract_strided_slice %176 {offsets = [0, 96], sizes = [1, 32], strides = [1, 1]} : vector<1x128xf32> to vector<1x32xf32>
    %186 = math.tanh %185 : vector<1x32xf32>
    %187 = vector.extract_strided_slice %184 {offsets = [0, 32], sizes = [1, 32], strides = [1, 1]} : vector<1x96xf32> to vector<1x32xf32>
    %188 = arith.mulf %187, %169 : vector<1x32xf32>
    %189 = vector.extract_strided_slice %184 {offsets = [0, 0], sizes = [1, 32], strides = [1, 1]} : vector<1x96xf32> to vector<1x32xf32>
    %190 = arith.mulf %189, %186 : vector<1x32xf32>
    %191 = arith.addf %188, %190 : vector<1x32xf32>
    %192 = vector.extract_strided_slice %184 {offsets = [0, 64], sizes = [1, 32], strides = [1, 1]} : vector<1x96xf32> to vector<1x32xf32>
    %193 = math.tanh %191 : vector<1x32xf32>
    %194 = arith.mulf %192, %193 : vector<1x32xf32>
    %c2 = arith.constant 2 : index
    %c0_62 = arith.constant 0 : index
    %195 = vector.load %arg17[%c2, %c0_62] : memref<6x32xf32, #tpu.memory_space<vmem>>, vector<1x32xf32>
    tpu.vector_store %arg17[%c2, %c0_62], %194 {strides = array<i32>} : memref<6x32xf32, #tpu.memory_space<vmem>>, vector<1x32xf32>,
    %196 = vector.extract_strided_slice %126 {offsets = [3, 0], sizes = [1, 128], strides = [1, 1]} : vector<8x128xf32> to vector<1x128xf32>
    %cst_63 = arith.constant dense<0.000000e+00> : vector<1x128xf32>
    %197 = tpu.matmul %194, %127, %cst_63 {dimension_numbers = #tpu.dot_dimension_numbers<[1], [0], [0], [1], [0, 0, 1, 1], [], []>} : vector<1x32xf32>, vector<32x128xf32>, vector<1x128xf32> -> vector<1x128xf32>
    %198 = arith.addf %196, %197 : vector<1x128xf32>
    %199 = vector.extract_strided_slice %198 {offsets = [0, 0], sizes = [1, 96], strides = [1, 1]} : vector<1x128xf32> to vector<1x96xf32>
    %cst_64 = arith.constant 5.000000e-01 : f32
    %200 = vector.broadcast %cst_64 : f32 to vector<1x96xf32>
    %201 = arith.mulf %200, %199 : vector<1x96xf32>
    %202 = math.tanh %201 : vector<1x96xf32>
    %cst_65 = arith.constant 1.000000e+00 : f32
    %203 = vector.broadcast %cst_65 : f32 to vector<1x96xf32>
    %204 = arith.addf %202, %203 : vector<1x96xf32>
    %cst_66 = arith.constant 5.000000e-01 : f32
    %205 = vector.broadcast %cst_66 : f32 to vector<1x96xf32>
    %206 = arith.mulf %205, %204 : vector<1x96xf32>
    %207 = vector.extract_strided_slice %198 {offsets = [0, 96], sizes = [1, 32], strides = [1, 1]} : vector<1x128xf32> to vector<1x32xf32>
    %208 = math.tanh %207 : vector<1x32xf32>
    %209 = vector.extract_strided_slice %206 {offsets = [0, 32], sizes = [1, 32], strides = [1, 1]} : vector<1x96xf32> to vector<1x32xf32>
    %210 = arith.mulf %209, %191 : vector<1x32xf32>
    %211 = vector.extract_strided_slice %206 {offsets = [0, 0], sizes = [1, 32], strides = [1, 1]} : vector<1x96xf32> to vector<1x32xf32>
    %212 = arith.mulf %211, %208 : vector<1x32xf32>
    %213 = arith.addf %210, %212 : vector<1x32xf32>
    %214 = vector.extract_strided_slice %206 {offsets = [0, 64], sizes = [1, 32], strides = [1, 1]} : vector<1x96xf32> to vector<1x32xf32>
    %215 = math.tanh %213 : vector<1x32xf32>
    %216 = arith.mulf %214, %215 : vector<1x32xf32>
    %c3 = arith.constant 3 : index
    %c0_67 = arith.constant 0 : index
    %217 = vector.load %arg17[%c3, %c0_67] : memref<6x32xf32, #tpu.memory_space<vmem>>, vector<1x32xf32>
    tpu.vector_store %arg17[%c3, %c0_67], %216 {strides = array<i32>} : memref<6x32xf32, #tpu.memory_space<vmem>>, vector<1x32xf32>,
    %218 = vector.extract_strided_slice %126 {offsets = [4, 0], sizes = [1, 128], strides = [1, 1]} : vector<8x128xf32> to vector<1x128xf32>
    %cst_68 = arith.constant dense<0.000000e+00> : vector<1x128xf32>
    %219 = tpu.matmul %216, %127, %cst_68 {dimension_numbers = #tpu.dot_dimension_numbers<[1], [0], [0], [1], [0, 0, 1, 1], [], []>} : vector<1x32xf32>, vector<32x128xf32>, vector<1x128xf32> -> vector<1x128xf32>
    %220 = arith.addf %218, %219 : vector<1x128xf32>
    %221 = vector.extract_strided_slice %220 {offsets = [0, 0], sizes = [1, 96], strides = [1, 1]} : vector<1x128xf32> to vector<1x96xf32>
    %cst_69 = arith.constant 5.000000e-01 : f32
    %222 = vector.broadcast %cst_69 : f32 to vector<1x96xf32>
    %223 = arith.mulf %222, %221 : vector<1x96xf32>
    %224 = math.tanh %223 : vector<1x96xf32>
    %cst_70 = arith.constant 1.000000e+00 : f32
    %225 = vector.broadcast %cst_70 : f32 to vector<1x96xf32>
    %226 = arith.addf %224, %225 : vector<1x96xf32>
    %cst_71 = arith.constant 5.000000e-01 : f32
    %227 = vector.broadcast %cst_71 : f32 to vector<1x96xf32>
    %228 = arith.mulf %227, %226 : vector<1x96xf32>
    %229 = vector.extract_strided_slice %220 {offsets = [0, 96], sizes = [1, 32], strides = [1, 1]} : vector<1x128xf32> to vector<1x32xf32>
    %230 = math.tanh %229 : vector<1x32xf32>
    %231 = vector.extract_strided_slice %228 {offsets = [0, 32], sizes = [1, 32], strides = [1, 1]} : vector<1x96xf32> to vector<1x32xf32>
    %232 = arith.mulf %231, %213 : vector<1x32xf32>
    %233 = vector.extract_strided_slice %228 {offsets = [0, 0], sizes = [1, 32], strides = [1, 1]} : vector<1x96xf32> to vector<1x32xf32>
    %234 = arith.mulf %233, %230 : vector<1x32xf32>
    %235 = arith.addf %232, %234 : vector<1x32xf32>
    %236 = vector.extract_strided_slice %228 {offsets = [0, 64], sizes = [1, 32], strides = [1, 1]} : vector<1x96xf32> to vector<1x32xf32>
    %237 = math.tanh %235 : vector<1x32xf32>
    %238 = arith.mulf %236, %237 : vector<1x32xf32>
    %c4 = arith.constant 4 : index
    %c0_72 = arith.constant 0 : index
    %239 = vector.load %arg17[%c4, %c0_72] : memref<6x32xf32, #tpu.memory_space<vmem>>, vector<1x32xf32>
    tpu.vector_store %arg17[%c4, %c0_72], %238 {strides = array<i32>} : memref<6x32xf32, #tpu.memory_space<vmem>>, vector<1x32xf32>,
    %240 = vector.extract_strided_slice %126 {offsets = [5, 0], sizes = [1, 128], strides = [1, 1]} : vector<8x128xf32> to vector<1x128xf32>
    %cst_73 = arith.constant dense<0.000000e+00> : vector<1x128xf32>
    %241 = tpu.matmul %238, %127, %cst_73 {dimension_numbers = #tpu.dot_dimension_numbers<[1], [0], [0], [1], [0, 0, 1, 1], [], []>} : vector<1x32xf32>, vector<32x128xf32>, vector<1x128xf32> -> vector<1x128xf32>
    %242 = arith.addf %240, %241 : vector<1x128xf32>
    %243 = vector.extract_strided_slice %242 {offsets = [0, 0], sizes = [1, 96], strides = [1, 1]} : vector<1x128xf32> to vector<1x96xf32>
    %cst_74 = arith.constant 5.000000e-01 : f32
    %244 = vector.broadcast %cst_74 : f32 to vector<1x96xf32>
    %245 = arith.mulf %244, %243 : vector<1x96xf32>
    %246 = math.tanh %245 : vector<1x96xf32>
    %cst_75 = arith.constant 1.000000e+00 : f32
    %247 = vector.broadcast %cst_75 : f32 to vector<1x96xf32>
    %248 = arith.addf %246, %247 : vector<1x96xf32>
    %cst_76 = arith.constant 5.000000e-01 : f32
    %249 = vector.broadcast %cst_76 : f32 to vector<1x96xf32>
    %250 = arith.mulf %249, %248 : vector<1x96xf32>
    %251 = vector.extract_strided_slice %242 {offsets = [0, 96], sizes = [1, 32], strides = [1, 1]} : vector<1x128xf32> to vector<1x32xf32>
    %252 = math.tanh %251 : vector<1x32xf32>
    %253 = vector.extract_strided_slice %250 {offsets = [0, 32], sizes = [1, 32], strides = [1, 1]} : vector<1x96xf32> to vector<1x32xf32>
    %254 = arith.mulf %253, %235 : vector<1x32xf32>
    %255 = vector.extract_strided_slice %250 {offsets = [0, 0], sizes = [1, 32], strides = [1, 1]} : vector<1x96xf32> to vector<1x32xf32>
    %256 = arith.mulf %255, %252 : vector<1x32xf32>
    %257 = arith.addf %254, %256 : vector<1x32xf32>
    %258 = vector.extract_strided_slice %250 {offsets = [0, 64], sizes = [1, 32], strides = [1, 1]} : vector<1x96xf32> to vector<1x32xf32>
    %259 = math.tanh %257 : vector<1x32xf32>
    %260 = arith.mulf %258, %259 : vector<1x32xf32>
    %c5 = arith.constant 5 : index
    %c0_77 = arith.constant 0 : index
    %261 = vector.load %arg17[%c5, %c0_77] : memref<6x32xf32, #tpu.memory_space<vmem>>, vector<1x32xf32>
    tpu.vector_store %arg17[%c5, %c0_77], %260 {strides = array<i32>} : memref<6x32xf32, #tpu.memory_space<vmem>>, vector<1x32xf32>,
    %c0_78 = arith.constant 0 : index
    %c0_79 = arith.constant 0 : index
    %262 = vector.load %arg17[%c0_78, %c0_79] : memref<6x32xf32, #tpu.memory_space<vmem>>, vector<6x32xf32>
    %c0_80 = arith.constant 0 : index
    %c0_81 = arith.constant 0 : index
    %263 = vector.load %arg14[%c0_80, %c0_81] : memref<32x6xf32, #tpu.memory_space<vmem>>, vector<32x6xf32>
    %cst_82 = arith.constant dense<0.000000e+00> : vector<6x6xf32>
    %264 = tpu.matmul %262, %263, %cst_82 {dimension_numbers = #tpu.dot_dimension_numbers<[1], [0], [0], [1], [0, 0, 1, 1], [], []>} : vector<6x32xf32>, vector<32x6xf32>, vector<6x6xf32> -> vector<6x6xf32>
    %c0_83 = arith.constant 0 : index
    %c0_84 = arith.constant 0 : index
    %265 = vector.load %arg15[%c0_83, %c0_84] : memref<1x6xf32, #tpu.memory_space<vmem>>, vector<1x6xf32>
    %266 = vector.broadcast %265 : vector<1x6xf32> to vector<6x6xf32>
    %267 = arith.addf %264, %266 : vector<6x6xf32>
    %cst_85 = arith.constant dense<0xFF800000> : vector<6xf32>
    %268 = vector.multi_reduction <maximumf>, %267, %cst_85 [1] : vector<6x6xf32> to vector<6xf32>
    %269 = vector.shape_cast %268 : vector<6xf32> to vector<6x1xf32>
    %270 = vector.broadcast %269 : vector<6x1xf32> to vector<6x6xf32>
    %271 = arith.subf %267, %270 : vector<6x6xf32>
    %272 = math.exp %271 : vector<6x6xf32>
    %cst_86 = arith.constant dense<0.000000e+00> : vector<6xf32>
    %273 = vector.multi_reduction <add>, %272, %cst_86 [1] : vector<6x6xf32> to vector<6xf32>
    %274 = vector.shape_cast %273 : vector<6xf32> to vector<6x1xf32>
    %275 = math.log %274 : vector<6x1xf32>
    %276 = vector.broadcast %275 : vector<6x1xf32> to vector<6x6xf32>
    %277 = arith.subf %271, %276 : vector<6x6xf32>
    %c0_87 = arith.constant 0 : index
    %c0_88 = arith.constant 0 : index
    %278 = vector.load %arg16[%c0_87, %c0_88] : memref<6x6xf32, #tpu.memory_space<vmem>>, vector<6x6xf32>
    tpu.vector_store %arg16[%c0_87, %c0_88], %277 {strides = array<i32>} : memref<6x6xf32, #tpu.memory_space<vmem>>, vector<6x6xf32>,
    return
  }
  func.func @transform_0(%arg0: i32) -> (i32, i32) {
    %c0_i32 = arith.constant 0 : i32
    %c0_i32_0 = arith.constant 0 : i32
    %c0_i32_1 = arith.constant 0 : i32
    return %c0_i32, %c0_i32_0 : i32, i32
  }
  func.func @transform_1(%arg0: i32) -> (i32, i32) {
    %c0_i32 = arith.constant 0 : i32
    %c0_i32_0 = arith.constant 0 : i32
    %c0_i32_1 = arith.constant 0 : i32
    return %c0_i32, %c0_i32_0 : i32, i32
  }
  func.func @transform_2(%arg0: i32) -> (i32, i32) {
    %c0_i32 = arith.constant 0 : i32
    %c0_i32_0 = arith.constant 0 : i32
    %c0_i32_1 = arith.constant 0 : i32
    return %c0_i32, %c0_i32_0 : i32, i32
  }
  func.func @transform_3(%arg0: i32) -> (i32, i32) {
    %c0_i32 = arith.constant 0 : i32
    %c0_i32_0 = arith.constant 0 : i32
    %c0_i32_1 = arith.constant 0 : i32
    return %c0_i32, %c0_i32_0 : i32, i32
  }
  func.func @transform_4(%arg0: i32) -> (i32, i32) {
    %c0_i32 = arith.constant 0 : i32
    %c0_i32_0 = arith.constant 0 : i32
    %c0_i32_1 = arith.constant 0 : i32
    return %c0_i32, %c0_i32_0 : i32, i32
  }
  func.func @transform_5(%arg0: i32) -> (i32, i32) {
    %c0_i32 = arith.constant 0 : i32
    %c0_i32_0 = arith.constant 0 : i32
    %c0_i32_1 = arith.constant 0 : i32
    return %c0_i32, %c0_i32_0 : i32, i32
  }
  func.func @transform_6(%arg0: i32) -> (i32, i32) {
    %c0_i32 = arith.constant 0 : i32
    %c0_i32_0 = arith.constant 0 : i32
    %c0_i32_1 = arith.constant 0 : i32
    return %c0_i32, %c0_i32_0 : i32, i32
  }
  func.func @transform_7(%arg0: i32) -> (i32, i32) {
    %c0_i32 = arith.constant 0 : i32
    %c0_i32_0 = arith.constant 0 : i32
    %c0_i32_1 = arith.constant 0 : i32
    return %c0_i32, %c0_i32_0 : i32, i32
  }
  func.func @transform_8(%arg0: i32) -> (i32, i32) {
    %c0_i32 = arith.constant 0 : i32
    %c0_i32_0 = arith.constant 0 : i32
    %c0_i32_1 = arith.constant 0 : i32
    return %c0_i32, %c0_i32_0 : i32, i32
  }
  func.func @transform_9(%arg0: i32) -> (i32, i32) {
    %c0_i32 = arith.constant 0 : i32
    %c0_i32_0 = arith.constant 0 : i32
    %c0_i32_1 = arith.constant 0 : i32
    return %c0_i32, %c0_i32_0 : i32, i32
  }
  func.func @transform_10(%arg0: i32) -> (i32, i32) {
    %c0_i32 = arith.constant 0 : i32
    %c0_i32_0 = arith.constant 0 : i32
    %c0_i32_1 = arith.constant 0 : i32
    return %c0_i32, %c0_i32_0 : i32, i32
  }
  func.func @transform_11(%arg0: i32) -> (i32, i32) {
    %c0_i32 = arith.constant 0 : i32
    %c0_i32_0 = arith.constant 0 : i32
    %c0_i32_1 = arith.constant 0 : i32
    return %c0_i32, %c0_i32_0 : i32, i32
  }
  func.func @transform_12(%arg0: i32) -> (i32, i32) {
    %c0_i32 = arith.constant 0 : i32
    %c0_i32_0 = arith.constant 0 : i32
    %c0_i32_1 = arith.constant 0 : i32
    return %c0_i32, %c0_i32_0 : i32, i32
  }
  func.func @transform_13(%arg0: i32) -> (i32, i32) {
    %c0_i32 = arith.constant 0 : i32
    %c0_i32_0 = arith.constant 0 : i32
    %c0_i32_1 = arith.constant 0 : i32
    return %c0_i32, %c0_i32_0 : i32, i32
  }
  func.func @transform_14(%arg0: i32) -> (i32, i32) {
    %c0_i32 = arith.constant 0 : i32
    %c0_i32_0 = arith.constant 0 : i32
    %c0_i32_1 = arith.constant 0 : i32
    return %c0_i32, %c0_i32_0 : i32, i32
  }
  func.func @transform_15(%arg0: i32) -> (i32, i32) {
    %c0_i32 = arith.constant 0 : i32
    %c0_i32_0 = arith.constant 0 : i32
    %c0_i32_1 = arith.constant 0 : i32
    return %c0_i32, %c0_i32_0 : i32, i32
  }
}

</mosaic_0001>

<llo_original>
// kernel: tpu_custom_call.1
$region0: #{tpu_custom_call.1}
  #allocation0 [shape = 'u32[]', space=smem, size = 0x4, offset = 0x4, fixed_abs, tag = 'smem constant byte address 0x4 - core index']
  #allocation1 [shape = 'u32[72,128]{1,0:T(1,128)}', space=vmem, size = 0x9000, scoped, tag = 'internal scratch']
  #allocation2 [shape = 'f32[6,32]{1,0:T(8,128)}', space=vmem, size = 0x1000, scoped, tag = 'scratch operand']
  %s0 = inlined_call_operand.vmem [shape: f32[40,8], index: 0, kind: input, shape index: {}]
  %s1 = inlined_call_operand.hbm [shape: f32[8,16], index: 1, kind: input, shape index: {}]
  %s2 = inlined_call_operand.hbm [shape: f32[8,64], index: 2, kind: input, shape index: {}]
  %s3 = inlined_call_operand.vmem [shape: f32[16,64], index: 3, kind: input, shape index: {}]
  %s4 = inlined_call_operand.vmem [shape: f32[1,64], index: 4, kind: input, shape index: {}]
  %s5 = inlined_call_operand.vmem [shape: f32[1,16], index: 5, kind: input, shape index: {}]
  %s6 = inlined_call_operand.vmem [shape: f32[1,16], index: 6, kind: input, shape index: {}]
  %s7 = inlined_call_operand.vmem [shape: f32[16,128], index: 7, kind: input, shape index: {}]
  %s8 = inlined_call_operand.vmem [shape: f32[16,128], index: 8, kind: input, shape index: {}]
  %s9 = inlined_call_operand.vmem [shape: f32[32,128], index: 9, kind: input, shape index: {}]
  %s10 = inlined_call_operand.vmem [shape: f32[1,128], index: 10, kind: input, shape index: {}]
  %s11 = inlined_call_operand.hbm [shape: f32[1,32], index: 11, kind: input, shape index: {}]
  %s12 = inlined_call_operand.hbm [shape: f32[1,32], index: 12, kind: input, shape index: {}]
  %s13 = inlined_call_operand.vmem [shape: f32[32,6], index: 13, kind: input, shape index: {}]
  %s14 = inlined_call_operand.vmem [shape: f32[1,6], index: 14, kind: input, shape index: {}]
  %s15 = inlined_call_operand.hbm [shape: f32[6,6], index: 15, kind: output, shape index: {}]
  %s16 = sld [smem:[#allocation0]]
  $region86: #{tpu_custom_call.1} parent=0
    _
  %s18 = ssub.s32 1, %s16
  %s19 = scalar_select 0, %s18, %s16
  $region1: #{tpu_custom_call.1} parent=0
    #allocation3 [shape = 'u8[4096]{0}', space=vmem, size = 0x1000, scoped, tag = 'input window, operand 1, single buffered']
    #allocation4 [shape = 's32[1]{0}', space=sflag, size = 0x4, scoped, tag = 'scoped memory for tpu_custom_call.1']
    #allocation5 [shape = 's32[1]{0}', space=sflag, size = 0x4, scoped, tag = 'scoped memory for tpu_custom_call.1']
    #allocation6 [shape = 'u8[4096]{0}', space=vmem, size = 0x1000, scoped, tag = 'input window, operand 2, single buffered']
    #allocation7 [shape = 's32[1]{0}', space=sflag, size = 0x4, scoped, tag = 'scoped memory for tpu_custom_call.1']
    #allocation8 [shape = 'u8[512]{0}', space=vmem, size = 0x400, scoped, tag = 'input window, operand 11, single buffered']
    #allocation9 [shape = 'u8[512]{0}', space=vmem, size = 0x400, scoped, tag = 'input window, operand 12, single buffered']
    #allocation10 [shape = 's32[1]{0}', space=sflag, size = 0x4, scoped, tag = 'scoped memory for tpu_custom_call.1']
    #allocation11 [shape = 'u8[4096]{0}', space=vmem, size = 0x1000, scoped, tag = 'output window, operand 0, single buffered']
    %20 = vsyncpa [#allocation4], 0
    %21 = vsyncpa [#allocation7], 0
    %22 = vsyncpa [#allocation10], 0
    %23 = vsyncpa [#allocation5], 0
    // Predicated region
    $region2: #{tpu_custom_call.1} parent=1 // pred_check
      _
    $region3: #{tpu_custom_call.1} parent=1 // pred_check_branch
      %25 = sbr.rel (0) target = $region5
    $region4: #{tpu_custom_call.1} parent=1 // pred_region
      _
    $region5: #{tpu_custom_call.1} parent=1 // pred_fallthru
      _
    // Predicated region
    $region6: #{tpu_custom_call.1} parent=1 // pred_check
      _
    $region7: #{tpu_custom_call.1} parent=1 // pred_check_branch
      %27 = sbr.rel (0) target = $region9
    $region8: #{tpu_custom_call.1} parent=1 // pred_region
      %29 = vsyncadd [#allocation4], 0
      %s31 = sshll.u32 %s1, 4
      %s32 = int_to_ptr.hbm [resolvable:$true] %s31
      %s33 = sshll.u32 [#allocation3], 4
      %s34 = int_to_ptr.vmem [resolvable:$true] %s33
      %36 = dma.hbm_to_vmem [thread:$0]  %s32, 128, %s34, [#allocation4]
    $region9: #{tpu_custom_call.1} parent=1 // pred_fallthru
      _
    // Predicated region
    $region10: #{tpu_custom_call.1} parent=1 // pred_check
      _
    $region11: #{tpu_custom_call.1} parent=1 // pred_check_branch
      %38 = sbr.rel (0) target = $region13
    $region12: #{tpu_custom_call.1} parent=1 // pred_region
      %40 = vsyncadd [#allocation7], 0
      %s42 = sshll.u32 %s2, 4
      %s43 = int_to_ptr.hbm [resolvable:$true] %s42
      %s44 = sshll.u32 [#allocation6], 4
      %s45 = int_to_ptr.vmem [resolvable:$true] %s44
      %47 = dma.hbm_to_vmem [thread:$0]  %s43, 128, %s45, [#allocation7]
    $region13: #{tpu_custom_call.1} parent=1 // pred_fallthru
      _
    // Predicated region
    $region14: #{tpu_custom_call.1} parent=1 // pred_check
      _
    $region15: #{tpu_custom_call.1} parent=1 // pred_check_branch
      %49 = sbr.rel (0) target = $region17
    $region16: #{tpu_custom_call.1} parent=1 // pred_region
      _
    $region17: #{tpu_custom_call.1} parent=1 // pred_fallthru
      _
    // Predicated region
    $region18: #{tpu_custom_call.1} parent=1 // pred_check
      _
    $region19: #{tpu_custom_call.1} parent=1 // pred_check_branch
      %51 = sbr.rel (0) target = $region21
    $region20: #{tpu_custom_call.1} parent=1 // pred_region
      _
    $region21: #{tpu_custom_call.1} parent=1 // pred_fallthru
      _
    // Predicated region
    $region22: #{tpu_custom_call.1} parent=1 // pred_check
      _
    $region23: #{tpu_custom_call.1} parent=1 // pred_check_branch
      %53 = sbr.rel (0) target = $region25
    $region24: #{tpu_custom_call.1} parent=1 // pred_region
      _
    $region25: #{tpu_custom_call.1} parent=1 // pred_fallthru
      _
    // Predicated region
    $region26: #{tpu_custom_call.1} parent=1 // pred_check
      _
    $region27: #{tpu_custom_call.1} parent=1 // pred_check_branch
      %55 = sbr.rel (0) target = $region29
    $region28: #{tpu_custom_call.1} parent=1 // pred_region
      _
    $region29: #{tpu_custom_call.1} parent=1 // pred_fallthru
      _
    // Predicated region
    $region30: #{tpu_custom_call.1} parent=1 // pred_check
      _
    $region31: #{tpu_custom_call.1} parent=1 // pred_check_branch
      %57 = sbr.rel (0) target = $region33
    $region32: #{tpu_custom_call.1} parent=1 // pred_region
      _
    $region33: #{tpu_custom_call.1} parent=1 // pred_fallthru
      _
    // Predicated region
    $region34: #{tpu_custom_call.1} parent=1 // pred_check
      _
    $region35: #{tpu_custom_call.1} parent=1 // pred_check_branch
      %59 = sbr.rel (0) target = $region37
    $region36: #{tpu_custom_call.1} parent=1 // pred_region
      _
    $region37: #{tpu_custom_call.1} parent=1 // pred_fallthru
      _
    // Predicated region
    $region38: #{tpu_custom_call.1} parent=1 // pred_check
      _
    $region39: #{tpu_custom_call.1} parent=1 // pred_check_branch
      %61 = sbr.rel (0) target = $region41
    $region40: #{tpu_custom_call.1} parent=1 // pred_region
      _
    $region41: #{tpu_custom_call.1} parent=1 // pred_fallthru
      _
    // Predicated region
    $region42: #{tpu_custom_call.1} parent=1 // pred_check
      _
    $region43: #{tpu_custom_call.1} parent=1 // pred_check_branch
      %63 = sbr.rel (0) target = $region45
    $region44: #{tpu_custom_call.1} parent=1 // pred_region
      _
    $region45: #{tpu_custom_call.1} parent=1 // pred_fallthru
      _
    // Predicated region
    $region46: #{tpu_custom_call.1} parent=1 // pred_check
      _
    $region47: #{tpu_custom_call.1} parent=1 // pred_check_branch
      %65 = sbr.rel (0) target = $region49
    $region48: #{tpu_custom_call.1} parent=1 // pred_region
      %67 = vsyncadd [#allocation7], 0
      %s69 = sshll.u32 %s11, 4
      %s70 = int_to_ptr.hbm [resolvable:$true] %s69
      %s71 = sshll.u32 [#allocation8], 4
      %s72 = int_to_ptr.vmem [resolvable:$true] %s71
      %74 = dma.hbm_to_vmem [thread:$0]  %s70, 16, %s72, [#allocation7]
    $region49: #{tpu_custom_call.1} parent=1 // pred_fallthru
      _
    // Predicated region
    $region50: #{tpu_custom_call.1} parent=1 // pred_check
      _
    $region51: #{tpu_custom_call.1} parent=1 // pred_check_branch
      %76 = sbr.rel (0) target = $region53
    $region52: #{tpu_custom_call.1} parent=1 // pred_region
      %78 = vsyncadd [#allocation10], 0
      %s80 = sshll.u32 %s12, 4
      %s81 = int_to_ptr.hbm [resolvable:$true] %s80
      %s82 = sshll.u32 [#allocation9], 4
      %s83 = int_to_ptr.vmem [resolvable:$true] %s82
      %85 = dma.hbm_to_vmem [thread:$0]  %s81, 16, %s83, [#allocation10]
    $region53: #{tpu_custom_call.1} parent=1 // pred_fallthru
      _
    // Predicated region
    $region54: #{tpu_custom_call.1} parent=1 // pred_check
      _
    $region55: #{tpu_custom_call.1} parent=1 // pred_check_branch
      %87 = sbr.rel (0) target = $region57
    $region56: #{tpu_custom_call.1} parent=1 // pred_region
      _
    $region57: #{tpu_custom_call.1} parent=1 // pred_fallthru
      _
    // Predicated region
    $region58: #{tpu_custom_call.1} parent=1 // pred_check
      _
    $region59: #{tpu_custom_call.1} parent=1 // pred_check_branch
      %89 = sbr.rel (0) target = $region61
    $region60: #{tpu_custom_call.1} parent=1 // pred_region
      _
    $region61: #{tpu_custom_call.1} parent=1 // pred_fallthru
      _
    // Predicated region
    $region62: #{tpu_custom_call.1} parent=1 // pred_check
      _
    $region63: #{tpu_custom_call.1} parent=1 // pred_check_branch
      %91 = sbr.rel (0) target = $region65
    $region64: #{tpu_custom_call.1} parent=1 // pred_region
      %93 = dma.done [#allocation4], 128
    $region65: #{tpu_custom_call.1} parent=1 // pred_fallthru
      _
    // Predicated region
    $region66: #{tpu_custom_call.1} parent=1 // pred_check
      _
    $region67: #{tpu_custom_call.1} parent=1 // pred_check_branch
      %95 = sbr.rel (0) target = $region69
    $region68: #{tpu_custom_call.1} parent=1 // pred_region
      %97 = dma.done [#allocation7], 128
    $region69: #{tpu_custom_call.1} parent=1 // pred_fallthru
      _
    // Predicated region
    $region70: #{tpu_custom_call.1} parent=1 // pred_check
      _
    $region71: #{tpu_custom_call.1} parent=1 // pred_check_branch
      %99 = sbr.rel (0) target = $region73
    $region72: #{tpu_custom_call.1} parent=1 // pred_region
      %101 = dma.done [#allocation7], 16
    $region73: #{tpu_custom_call.1} parent=1 // pred_fallthru
      _
    // Predicated region
    $region74: #{tpu_custom_call.1} parent=1 // pred_check
      _
    $region75: #{tpu_custom_call.1} parent=1 // pred_check_branch
      %103 = sbr.rel (0) target = $region77
    $region76: #{tpu_custom_call.1} parent=1 // pred_region
      %105 = dma.done [#allocation10], 16
    $region77: #{tpu_custom_call.1} parent=1 // pred_fallthru
      _
    %v106 = vld [vmem:[%s0] sm:$0xff]
    %v107 = vld [vmem:[%s0 + $0x8] sm:$0xff]
    %v108 = vld [vmem:[%s0 + $0x10] sm:$0xff]
    %v109 = vld [vmem:[%s0 + $0x18] sm:$0xff]
    %v110 = vld [vmem:[%s0 + $0x20] sm:$0xff]
    %v111 = vld [vmem:[#allocation6] sm:$0xff]
    %v112 = vld [vmem:[%s4] sm:$0x1]
    %v114 = vperm.slane %v112, 0
    %vm116 = vcmask 64512
    %v118 = vsel %vm116, %v106, 0
    %v121 = vsel %vm116, %v107, 0
    %v124 = vsel %vm116, %v108, 0
    %v127 = vsel %vm116, %v109, 0
    %v130 = vsel %vm116, %v110, 0
    %132 = vmatpush.msra.mxu0 0.0
    %133 = vmatpush.msra.mxu0 0.0
    %134 = vmatpush.msra.mxu0 0.0
    %135 = vmatpush.msra.mxu0 0.0
    %136 = vmatpush.msra.mxu0 0.0
    %137 = vmatpush.msra.mxu0 0.0
    %138 = vmatpush.msra.mxu0 0.0
    %139 = vmatpush.msra.mxu0 0.0
    %140 = vmatpush.msra.mxu0 0.0
    %141 = vmatpush.msra.mxu0 0.0
    %142 = vmatpush.msra.mxu0 0.0
    %143 = vmatpush.msra.mxu0 0.0
    %144 = vmatpush.msra.mxu0 0.0
    %145 = vmatpush.msra.mxu0 0.0
    %146 = vmatpush.msra.mxu0 0.0
    %147 = vmatpush.msra.mxu0 %v111
    %148 = vmatmul.f32.gmra.mxu0 %v118
    %v149 = vpop.f32.mrf.mxu0
    %v150 = vadd.f32 %v114, %v149
    %151 = vmatmul.f32.gmra.mxu0 %v121
    %v152 = vpop.f32.mrf.mxu0
    %v153 = vadd.f32 %v114, %v152
    %154 = vmatmul.f32.gmra.mxu0 %v124
    %v155 = vpop.f32.mrf.mxu0
    %v156 = vadd.f32 %v114, %v155
    %157 = vmatmul.f32.gmra.mxu0 %v127
    %v158 = vpop.f32.mrf.mxu0
    %v159 = vadd.f32 %v114, %v158
    %160 = vmatmul.f32.gmra.mxu0 %v130
    %v161 = vpop.f32.mrf.mxu0
    %v162 = vadd.f32 %v114, %v161
    %163 = vdwg.mxu0
    %v164 = vld [vmem:[%s3] sm:$0xff]
    %v165 = vld [vmem:[%s3 + $0x8] sm:$0xff]
    %v166 = vld [vmem:[%s5] sm:$0x1]
    %v168 = vperm.slane %v166, 0
    %v169 = vld [vmem:[%s6] sm:$0x1]
    %v171 = vperm.slane %v169, 0
    %vm172 = vcmask 130048
    %v173 = vsel %vm172, %v168, 0
    %175 = vmatpush.msra.mxu0 0.0
    %176 = vmatpush.msra.mxu0 0.0
    %177 = vmatpush.msra.mxu0 0.0
    %178 = vmatpush.msra.mxu0 0.0
    %179 = vmatpush.msra.mxu0 0.0
    %180 = vmatpush.msra.mxu0 0.0
    %181 = vmatpush.msra.mxu0 0.0
    %182 = vmatpush.msra.mxu0 0.0
    %183 = vmatpush.msra.mxu0 0.0
    %184 = vmatpush.msra.mxu0 0.0
    %185 = vmatpush.msra.mxu0 0.0
    %186 = vmatpush.msra.mxu0 0.0
    %187 = vmatpush.msra.mxu0 0.0
    %188 = vmatpush.msra.mxu0 0.0
    %189 = vmatpush.msra.mxu0 %v165
    %190 = vmatpush.msra.mxu0 %v164
    %191 = vmatmul.f32.gmra.mxu0 %v173
    %v192 = vpop.f32.mrf.mxu0
    %v193 = vadd.f32 0.0, %v192
    %194 = vdwg.mxu0
    %v195 = vadd.f32 %v150, %v193
    %v196 = vmul.f32 %v195, 0.5
    %v197 = vtanh.pop %v196
    %v198 = vadd.f32 %v197, 1.0
    %v199 = vmul.f32 %v198, 0.5
    %v200 = vtanh.pop %v195
    %201 = vrot.lane.b32.xlu0 %v171, 16
    %v202 = vpop.permute.xlu0 %201
    %v204 = vmul.f32 %v199, %v202
    %206 = vrot.lane.b32.xlu0 %v200, 80
    %v207 = vpop.permute.xlu0 %206
    %v209 = vmul.f32 %v199, %v207
    %211 = vrot.lane.b32.xlu0 %v209, 16
    %v212 = vpop.permute.xlu0 %211
    %v214 = vadd.f32 %v204, %v212
    %v215 = vtanh.pop %v214
    %217 = vrot.lane.b32.xlu0 %v215, 16
    %v218 = vpop.permute.xlu0 %217
    %v220 = vmul.f32 %v199, %v218
    %222 = vrot.lane.b32.xlu0 %v220, 96
    %v223 = vpop.permute.xlu0 %222
    %v224 = vsel %vm172, %v223, 0
    %226 = vmatpush.msra.mxu0 0.0
    %227 = vmatpush.msra.mxu0 0.0
    %228 = vmatpush.msra.mxu0 0.0
    %229 = vmatpush.msra.mxu0 0.0
    %230 = vmatpush.msra.mxu0 0.0
    %231 = vmatpush.msra.mxu0 0.0
    %232 = vmatpush.msra.mxu0 0.0
    %233 = vmatpush.msra.mxu0 0.0
    %234 = vmatpush.msra.mxu0 0.0
    %235 = vmatpush.msra.mxu0 0.0
    %236 = vmatpush.msra.mxu0 0.0
    %237 = vmatpush.msra.mxu0 0.0
    %238 = vmatpush.msra.mxu0 0.0
    %239 = vmatpush.msra.mxu0 0.0
    %240 = vmatpush.msra.mxu0 %v165
    %241 = vmatpush.msra.mxu0 %v164
    %242 = vmatmul.f32.gmra.mxu0 %v224
    %v243 = vpop.f32.mrf.mxu0
    %v244 = vadd.f32 0.0, %v243
    %245 = vdwg.mxu0
    %v246 = vadd.f32 %v153, %v244
    %v247 = vmul.f32 %v246, 0.5
    %v248 = vtanh.pop %v247
    %v249 = vadd.f32 %v248, 1.0
    %v250 = vmul.f32 %v249, 0.5
    %v251 = vtanh.pop %v246
    %v252 = vmul.f32 %v250, %v214
    %254 = vrot.lane.b32.xlu0 %v251, 80
    %v255 = vpop.permute.xlu0 %254
    %v257 = vmul.f32 %v250, %v255
    %259 = vrot.lane.b32.xlu0 %v257, 16
    %v260 = vpop.permute.xlu0 %259
    %v262 = vadd.f32 %v252, %v260
    %v263 = vtanh.pop %v262
    %265 = vrot.lane.b32.xlu0 %v263, 16
    %v266 = vpop.permute.xlu0 %265
    %v268 = vmul.f32 %v250, %v266
    %270 = vrot.lane.b32.xlu0 %v268, 96
    %v271 = vpop.permute.xlu0 %270
    %v272 = vsel %vm172, %v271, 0
    %274 = vmatpush.msra.mxu0 0.0
    %275 = vmatpush.msra.mxu0 0.0
    %276 = vmatpush.msra.mxu0 0.0
    %277 = vmatpush.msra.mxu0 0.0
    %278 = vmatpush.msra.mxu0 0.0
    %279 = vmatpush.msra.mxu0 0.0
    %280 = vmatpush.msra.mxu0 0.0
    %281 = vmatpush.msra.mxu0 0.0
    %282 = vmatpush.msra.mxu0 0.0
    %283 = vmatpush.msra.mxu0 0.0
    %284 = vmatpush.msra.mxu0 0.0
    %285 = vmatpush.msra.mxu0 0.0
    %286 = vmatpush.msra.mxu0 0.0
    %287 = vmatpush.msra.mxu0 0.0
    %288 = vmatpush.msra.mxu0 %v165
    %289 = vmatpush.msra.mxu0 %v164
    %290 = vmatmul.f32.gmra.mxu0 %v272
    %v291 = vpop.f32.mrf.mxu0
    %v292 = vadd.f32 0.0, %v291
    %293 = vdwg.mxu0
    %v294 = vadd.f32 %v156, %v292
    %v295 = vmul.f32 %v294, 0.5
    %v296 = vtanh.pop %v295
    %v297 = vadd.f32 %v296, 1.0
    %v298 = vmul.f32 %v297, 0.5
    %v299 = vtanh.pop %v294
    %v300 = vmul.f32 %v298, %v262
    %302 = vrot.lane.b32.xlu0 %v299, 80
    %v303 = vpop.permute.xlu0 %302
    %v305 = vmul.f32 %v298, %v303
    %307 = vrot.lane.b32.xlu0 %v305, 16
    %v308 = vpop.permute.xlu0 %307
    %v310 = vadd.f32 %v300, %v308
    %v311 = vtanh.pop %v310
    %313 = vrot.lane.b32.xlu0 %v311, 16
    %v314 = vpop.permute.xlu0 %313
    %v316 = vmul.f32 %v298, %v314
    %318 = vrot.lane.b32.xlu0 %v316, 96
    %v319 = vpop.permute.xlu0 %318
    %v320 = vsel %vm172, %v319, 0
    %322 = vmatpush.msra.mxu0 0.0
    %323 = vmatpush.msra.mxu0 0.0
    %324 = vmatpush.msra.mxu0 0.0
    %325 = vmatpush.msra.mxu0 0.0
    %326 = vmatpush.msra.mxu0 0.0
    %327 = vmatpush.msra.mxu0 0.0
    %328 = vmatpush.msra.mxu0 0.0
    %329 = vmatpush.msra.mxu0 0.0
    %330 = vmatpush.msra.mxu0 0.0
    %331 = vmatpush.msra.mxu0 0.0
    %332 = vmatpush.msra.mxu0 0.0
    %333 = vmatpush.msra.mxu0 0.0
    %334 = vmatpush.msra.mxu0 0.0
    %335 = vmatpush.msra.mxu0 0.0
    %336 = vmatpush.msra.mxu0 %v165
    %337 = vmatpush.msra.mxu0 %v164
    %338 = vmatmul.f32.gmra.mxu0 %v320
    %v339 = vpop.f32.mrf.mxu0
    %v340 = vadd.f32 0.0, %v339
    %341 = vdwg.mxu0
    %v342 = vadd.f32 %v159, %v340
    %v343 = vmul.f32 %v342, 0.5
    %v344 = vtanh.pop %v343
    %v345 = vadd.f32 %v344, 1.0
    %v346 = vmul.f32 %v345, 0.5
    %v347 = vtanh.pop %v342
    %v348 = vmul.f32 %v346, %v310
    %350 = vrot.lane.b32.xlu0 %v347, 80
    %v351 = vpop.permute.xlu0 %350
    %v353 = vmul.f32 %v346, %v351
    %355 = vrot.lane.b32.xlu0 %v353, 16
    %v356 = vpop.permute.xlu0 %355
    %v358 = vadd.f32 %v348, %v356
    %v359 = vtanh.pop %v358
    %361 = vrot.lane.b32.xlu0 %v359, 16
    %v362 = vpop.permute.xlu0 %361
    %v364 = vmul.f32 %v346, %v362
    %366 = vrot.lane.b32.xlu0 %v364, 96
    %v367 = vpop.permute.xlu0 %366
    %v368 = vsel %vm172, %v367, 0
    %370 = vmatpush.msra.mxu0 0.0
    %371 = vmatpush.msra.mxu0 0.0
    %372 = vmatpush.msra.mxu0 0.0
    %373 = vmatpush.msra.mxu0 0.0
    %374 = vmatpush.msra.mxu0 0.0
    %375 = vmatpush.msra.mxu0 0.0
    %376 = vmatpush.msra.mxu0 0.0
    %377 = vmatpush.msra.mxu0 0.0
    %378 = vmatpush.msra.mxu0 0.0
    %379 = vmatpush.msra.mxu0 0.0
    %380 = vmatpush.msra.mxu0 0.0
    %381 = vmatpush.msra.mxu0 0.0
    %382 = vmatpush.msra.mxu0 0.0
    %383 = vmatpush.msra.mxu0 0.0
    %384 = vmatpush.msra.mxu0 %v165
    %385 = vmatpush.msra.mxu0 %v164
    %386 = vmatmul.f32.gmra.mxu0 %v368
    %v387 = vpop.f32.mrf.mxu0
    %v388 = vadd.f32 0.0, %v387
    %389 = vdwg.mxu0
    %v390 = vadd.f32 %v162, %v388
    %v391 = vmul.f32 %v390, 0.5
    %v392 = vtanh.pop %v391
    %v393 = vadd.f32 %v392, 1.0
    %v394 = vmul.f32 %v393, 0.5
    %v395 = vtanh.pop %v390
    %v396 = vmul.f32 %v394, %v358
    %398 = vrot.lane.b32.xlu0 %v395, 80
    %v399 = vpop.permute.xlu0 %398
    %v401 = vmul.f32 %v394, %v399
    %403 = vrot.lane.b32.xlu0 %v401, 16
    %v404 = vpop.permute.xlu0 %403
    %v406 = vadd.f32 %v396, %v404
    %v407 = vtanh.pop %v406
    %409 = vrot.lane.b32.xlu0 %v407, 16
    %v410 = vpop.permute.xlu0 %409
    %v412 = vmul.f32 %v394, %v410
    %v413 = vld [vmem:[%s7] sm:$0xff]
    %v414 = vld [vmem:[%s7 + $0x8] sm:$0xff]
    %v415 = vld [vmem:[#allocation3] sm:$0xff]
    %v416 = vld [vmem:[%s8] sm:$0xff]
    %v417 = vld [vmem:[%s8 + $0x8] sm:$0xff]
    %v419 = vsel %vm172, %v415, 0
    %421 = vmatpush.msra.mxu0 0.0
    %422 = vmatpush.msra.mxu0 0.0
    %423 = vmatpush.msra.mxu0 0.0
    %424 = vmatpush.msra.mxu0 0.0
    %425 = vmatpush.msra.mxu0 0.0
    %426 = vmatpush.msra.mxu0 0.0
    %427 = vmatpush.msra.mxu0 0.0
    %428 = vmatpush.msra.mxu0 0.0
    %429 = vmatpush.msra.mxu0 0.0
    %430 = vmatpush.msra.mxu0 0.0
    %431 = vmatpush.msra.mxu0 0.0
    %432 = vmatpush.msra.mxu0 0.0
    %433 = vmatpush.msra.mxu0 0.0
    %434 = vmatpush.msra.mxu0 0.0
    %435 = vmatpush.msra.mxu0 %v417
    %436 = vmatpush.msra.mxu0 %v416
    %437 = vmatmul.f32.gmra.mxu0 %v419
    %v438 = vpop.f32.mrf.mxu0
    %v439 = vadd.f32 0.0, %v438
    %440 = vdwg.mxu0
    %442 = vrot.lane.b32.xlu0 %v412, 96
    %v443 = vpop.permute.xlu0 %442
    %v444 = vsel %vm172, %v443, 0
    %446 = vmatpush.msra.mxu0 0.0
    %447 = vmatpush.msra.mxu0 0.0
    %448 = vmatpush.msra.mxu0 0.0
    %449 = vmatpush.msra.mxu0 0.0
    %450 = vmatpush.msra.mxu0 0.0
    %451 = vmatpush.msra.mxu0 0.0
    %452 = vmatpush.msra.mxu0 0.0
    %453 = vmatpush.msra.mxu0 0.0
    %454 = vmatpush.msra.mxu0 0.0
    %455 = vmatpush.msra.mxu0 0.0
    %456 = vmatpush.msra.mxu0 0.0
    %457 = vmatpush.msra.mxu0 0.0
    %458 = vmatpush.msra.mxu0 0.0
    %459 = vmatpush.msra.mxu0 0.0
    %460 = vmatpush.msra.mxu0 %v414
    %461 = vmatpush.msra.mxu0 %v413
    %462 = vmatmul.f32.gmra.mxu0 %v444
    %v463 = vpop.f32.mrf.mxu0
    %v464 = vadd.f32 %v439, %v463
    %465 = vdwg.mxu0
    %v466 = vld [vmem:[%s10] sm:$0x1]
    %v468 = vperm.slane %v466, 0
    %v470 = vadd.f32 %v464, %v468
    %v471 = vld [vmem:[%s9] sm:$0xff]
    %v472 = vld [vmem:[%s9 + $0x8] sm:$0xff]
    %v473 = vld [vmem:[%s9 + $0x10] sm:$0xff]
    %v474 = vld [vmem:[%s9 + $0x18] sm:$0xff]
    %v475 = vld [vmem:[#allocation8] sm:$0x1]
    %v476 = vld [vmem:[#allocation9] sm:$0x1]
    %vm477 = vcmask 261120
    %v479 = vsel %vm477, %v475, 0
    %481 = vmatpush.msra.mxu0 0.0
    %482 = vmatpush.msra.mxu0 0.0
    %483 = vmatpush.msra.mxu0 0.0
    %484 = vmatpush.msra.mxu0 0.0
    %485 = vmatpush.msra.mxu0 0.0
    %486 = vmatpush.msra.mxu0 0.0
    %487 = vmatpush.msra.mxu0 0.0
    %488 = vmatpush.msra.mxu0 0.0
    %489 = vmatpush.msra.mxu0 0.0
    %490 = vmatpush.msra.mxu0 0.0
    %491 = vmatpush.msra.mxu0 0.0
    %492 = vmatpush.msra.mxu0 0.0
    %493 = vmatpush.msra.mxu0 %v474
    %494 = vmatpush.msra.mxu0 %v473
    %495 = vmatpush.msra.mxu0 %v472
    %496 = vmatpush.msra.mxu0 %v471
    %497 = vmatmul.f32.gmra.mxu0 %v479
    %v498 = vpop.f32.mrf.mxu0
    %v499 = vadd.f32 0.0, %v498
    %500 = vdwg.mxu0
    %v501 = vadd.f32 %v470, %v499
    %v502 = vmul.f32 %v501, 0.5
    %v503 = vtanh.pop %v502
    %v504 = vadd.f32 %v503, 1.0
    %v505 = vmul.f32 %v504, 0.5
    %v506 = vtanh.pop %v501
    %v508 = vperm.slane %v476, 0
    %509 = vrot.lane.b32.xlu0 %v508, 32
    %v510 = vpop.permute.xlu0 %509
    %v512 = vmul.f32 %v505, %v510
    %514 = vrot.lane.b32.xlu0 %v506, 32
    %v515 = vpop.permute.xlu0 %514
    %v517 = vmul.f32 %v505, %v515
    %519 = vrot.lane.b32.xlu0 %v517, 32
    %v520 = vpop.permute.xlu0 %519
    %v522 = vadd.f32 %v512, %v520
    %v523 = vtanh.pop %v522
    %525 = vrot.lane.b32.xlu0 %v523, 32
    %v526 = vpop.permute.xlu0 %525
    %v528 = vmul.f32 %v505, %v526
    %530 = vrot.lane.b32.xlu0 %v528, 64
    %v531 = vpop.permute.xlu0 %530
    %vm533 = vcmask 253952
    %534 = vst.msk [vmem:[#allocation2] sm:$0x1] %vm533, %v531
    %v535 = vsel %vm477, %v531, 0
    %537 = vmatpush.msra.mxu0 0.0
    %538 = vmatpush.msra.mxu0 0.0
    %539 = vmatpush.msra.mxu0 0.0
    %540 = vmatpush.msra.mxu0 0.0
    %541 = vmatpush.msra.mxu0 0.0
    %542 = vmatpush.msra.mxu0 0.0
    %543 = vmatpush.msra.mxu0 0.0
    %544 = vmatpush.msra.mxu0 0.0
    %545 = vmatpush.msra.mxu0 0.0
    %546 = vmatpush.msra.mxu0 0.0
    %547 = vmatpush.msra.mxu0 0.0
    %548 = vmatpush.msra.mxu0 0.0
    %549 = vmatpush.msra.mxu0 %v474
    %550 = vmatpush.msra.mxu0 %v473
    %551 = vmatpush.msra.mxu0 %v472
    %552 = vmatpush.msra.mxu0 %v471
    %553 = vmatmul.f32.gmra.mxu0 %v535
    %v554 = vpop.f32.mrf.mxu0
    %v555 = vadd.f32 0.0, %v554
    %556 = vdwg.mxu0
    %v558 = vrot.slane %v555, 7
    %v560 = vadd.f32 %v470, %v558
    %v561 = vmul.f32 %v560, 0.5
    %v562 = vtanh.pop %v561
    %v563 = vadd.f32 %v562, 1.0
    %v564 = vmul.f32 %v563, 0.5
    %v565 = vtanh.pop %v560
    %v567 = vrot.slane %v522, 7
    %v569 = vmul.f32 %v564, %v567
    %571 = vrot.lane.b32.xlu0 %v565, 32
    %v572 = vpop.permute.xlu0 %571
    %v574 = vmul.f32 %v564, %v572
    %576 = vrot.lane.b32.xlu0 %v574, 32
    %v577 = vpop.permute.xlu0 %576
    %v579 = vadd.f32 %v569, %v577
    %v580 = vtanh.pop %v579
    %582 = vrot.lane.b32.xlu0 %v580, 32
    %v583 = vpop.permute.xlu0 %582
    %v585 = vmul.f32 %v564, %v583
    %587 = vrot.lane.b32.xlu0 %v585, 64
    %v588 = vpop.permute.xlu0 %587
    %vm590 = vcmask 254977
    %591 = vst.msk [vmem:[#allocation2] sm:$0x2] %vm590, %v588
    %v592 = vrot.slane %v585, 1
    %593 = vrot.lane.b32.xlu0 %v592, 64
    %v594 = vpop.permute.xlu0 %593
    %v595 = vsel %vm477, %v594, 0
    %597 = vmatpush.msra.mxu0 0.0
    %598 = vmatpush.msra.mxu0 0.0
    %599 = vmatpush.msra.mxu0 0.0
    %600 = vmatpush.msra.mxu0 0.0
    %601 = vmatpush.msra.mxu0 0.0
    %602 = vmatpush.msra.mxu0 0.0
    %603 = vmatpush.msra.mxu0 0.0
    %604 = vmatpush.msra.mxu0 0.0
    %605 = vmatpush.msra.mxu0 0.0
    %606 = vmatpush.msra.mxu0 0.0
    %607 = vmatpush.msra.mxu0 0.0
    %608 = vmatpush.msra.mxu0 0.0
    %609 = vmatpush.msra.mxu0 %v474
    %610 = vmatpush.msra.mxu0 %v473
    %611 = vmatpush.msra.mxu0 %v472
    %612 = vmatpush.msra.mxu0 %v471
    %613 = vmatmul.f32.gmra.mxu0 %v595
    %v614 = vpop.f32.mrf.mxu0
    %v615 = vadd.f32 0.0, %v614
    %616 = vdwg.mxu0
    %v618 = vrot.slane %v615, 6
    %v620 = vadd.f32 %v470, %v618
    %v621 = vmul.f32 %v620, 0.5
    %v622 = vtanh.pop %v621
    %v623 = vadd.f32 %v622, 1.0
    %v624 = vmul.f32 %v623, 0.5
    %v625 = vtanh.pop %v620
    %v627 = vrot.slane %v579, 7
    %v629 = vmul.f32 %v624, %v627
    %631 = vrot.lane.b32.xlu0 %v625, 32
    %v632 = vpop.permute.xlu0 %631
    %v634 = vmul.f32 %v624, %v632
    %636 = vrot.lane.b32.xlu0 %v634, 32
    %v637 = vpop.permute.xlu0 %636
    %v639 = vadd.f32 %v629, %v637
    %v640 = vtanh.pop %v639
    %642 = vrot.lane.b32.xlu0 %v640, 32
    %v643 = vpop.permute.xlu0 %642
    %v645 = vmul.f32 %v624, %v643
    %647 = vrot.lane.b32.xlu0 %v645, 64
    %v648 = vpop.permute.xlu0 %647
    %vm650 = vcmask 256002
    %651 = vst.msk [vmem:[#allocation2] sm:$0x4] %vm650, %v648
    %v652 = vrot.slane %v645, 2
    %653 = vrot.lane.b32.xlu0 %v652, 64
    %v654 = vpop.permute.xlu0 %653
    %v655 = vsel %vm477, %v654, 0
    %657 = vmatpush.msra.mxu0 0.0
    %658 = vmatpush.msra.mxu0 0.0
    %659 = vmatpush.msra.mxu0 0.0
    %660 = vmatpush.msra.mxu0 0.0
    %661 = vmatpush.msra.mxu0 0.0
    %662 = vmatpush.msra.mxu0 0.0
    %663 = vmatpush.msra.mxu0 0.0
    %664 = vmatpush.msra.mxu0 0.0
    %665 = vmatpush.msra.mxu0 0.0
    %666 = vmatpush.msra.mxu0 0.0
    %667 = vmatpush.msra.mxu0 0.0
    %668 = vmatpush.msra.mxu0 0.0
    %669 = vmatpush.msra.mxu0 %v474
    %670 = vmatpush.msra.mxu0 %v473
    %671 = vmatpush.msra.mxu0 %v472
    %672 = vmatpush.msra.mxu0 %v471
    %673 = vmatmul.f32.gmra.mxu0 %v655
    %v674 = vpop.f32.mrf.mxu0
    %v675 = vadd.f32 0.0, %v674
    %676 = vdwg.mxu0
    %v678 = vrot.slane %v675, 5
    %v680 = vadd.f32 %v470, %v678
    %v681 = vmul.f32 %v680, 0.5
    %v682 = vtanh.pop %v681
    %v683 = vadd.f32 %v682, 1.0
    %v684 = vmul.f32 %v683, 0.5
    %v685 = vtanh.pop %v680
    %v687 = vrot.slane %v639, 7
    %v689 = vmul.f32 %v684, %v687
    %691 = vrot.lane.b32.xlu0 %v685, 32
    %v692 = vpop.permute.xlu0 %691
    %v694 = vmul.f32 %v684, %v692
    %696 = vrot.lane.b32.xlu0 %v694, 32
    %v697 = vpop.permute.xlu0 %696
    %v699 = vadd.f32 %v689, %v697
    %v700 = vtanh.pop %v699
    %702 = vrot.lane.b32.xlu0 %v700, 32
    %v703 = vpop.permute.xlu0 %702
    %v705 = vmul.f32 %v684, %v703
    %707 = vrot.lane.b32.xlu0 %v705, 64
    %v708 = vpop.permute.xlu0 %707
    %vm710 = vcmask 257027
    %711 = vst.msk [vmem:[#allocation2] sm:$0x8] %vm710, %v708
    %v712 = vrot.slane %v705, 3
    %713 = vrot.lane.b32.xlu0 %v712, 64
    %v714 = vpop.permute.xlu0 %713
    %v715 = vsel %vm477, %v714, 0
    %717 = vmatpush.msra.mxu0 0.0
    %718 = vmatpush.msra.mxu0 0.0
    %719 = vmatpush.msra.mxu0 0.0
    %720 = vmatpush.msra.mxu0 0.0
    %721 = vmatpush.msra.mxu0 0.0
    %722 = vmatpush.msra.mxu0 0.0
    %723 = vmatpush.msra.mxu0 0.0
    %724 = vmatpush.msra.mxu0 0.0
    %725 = vmatpush.msra.mxu0 0.0
    %726 = vmatpush.msra.mxu0 0.0
    %727 = vmatpush.msra.mxu0 0.0
    %728 = vmatpush.msra.mxu0 0.0
    %729 = vmatpush.msra.mxu0 %v474
    %730 = vmatpush.msra.mxu0 %v473
    %731 = vmatpush.msra.mxu0 %v472
    %732 = vmatpush.msra.mxu0 %v471
    %733 = vmatmul.f32.gmra.mxu0 %v715
    %v734 = vpop.f32.mrf.mxu0
    %v735 = vadd.f32 0.0, %v734
    %736 = vdwg.mxu0
    %v738 = vrot.slane %v735, 4
    %v740 = vadd.f32 %v470, %v738
    %v741 = vmul.f32 %v740, 0.5
    %v742 = vtanh.pop %v741
    %v743 = vadd.f32 %v742, 1.0
    %v744 = vmul.f32 %v743, 0.5
    %v745 = vtanh.pop %v740
    %v747 = vrot.slane %v699, 7
    %v749 = vmul.f32 %v744, %v747
    %751 = vrot.lane.b32.xlu0 %v745, 32
    %v752 = vpop.permute.xlu0 %751
    %v754 = vmul.f32 %v744, %v752
    %756 = vrot.lane.b32.xlu0 %v754, 32
    %v757 = vpop.permute.xlu0 %756
    %v759 = vadd.f32 %v749, %v757
    %v760 = vtanh.pop %v759
    %762 = vrot.lane.b32.xlu0 %v760, 32
    %v763 = vpop.permute.xlu0 %762
    %v765 = vmul.f32 %v744, %v763
    %767 = vrot.lane.b32.xlu0 %v765, 64
    %v768 = vpop.permute.xlu0 %767
    %vm770 = vcmask 258052
    %771 = vst.msk [vmem:[#allocation2] sm:$0x10] %vm770, %v768
    %v772 = vrot.slane %v765, 4
    %773 = vrot.lane.b32.xlu0 %v772, 64
    %v774 = vpop.permute.xlu0 %773
    %v775 = vsel %vm477, %v774, 0
    %777 = vmatpush.msra.mxu0 0.0
    %778 = vmatpush.msra.mxu0 0.0
    %779 = vmatpush.msra.mxu0 0.0
    %780 = vmatpush.msra.mxu0 0.0
    %781 = vmatpush.msra.mxu0 0.0
    %782 = vmatpush.msra.mxu0 0.0
    %783 = vmatpush.msra.mxu0 0.0
    %784 = vmatpush.msra.mxu0 0.0
    %785 = vmatpush.msra.mxu0 0.0
    %786 = vmatpush.msra.mxu0 0.0
    %787 = vmatpush.msra.mxu0 0.0
    %788 = vmatpush.msra.mxu0 0.0
    %789 = vmatpush.msra.mxu0 %v474
    %790 = vmatpush.msra.mxu0 %v473
    %791 = vmatpush.msra.mxu0 %v472
    %792 = vmatpush.msra.mxu0 %v471
    %793 = vmatmul.f32.gmra.mxu0 %v775
    %v794 = vpop.f32.mrf.mxu0
    %v795 = vadd.f32 0.0, %v794
    %796 = vdwg.mxu0
    %v798 = vrot.slane %v795, 3
    %v800 = vadd.f32 %v470, %v798
    %v801 = vmul.f32 %v800, 0.5
    %v802 = vtanh.pop %v801
    %v803 = vadd.f32 %v802, 1.0
    %v804 = vmul.f32 %v803, 0.5
    %v805 = vtanh.pop %v800
    %v807 = vrot.slane %v759, 7
    %v809 = vmul.f32 %v804, %v807
    %811 = vrot.lane.b32.xlu0 %v805, 32
    %v812 = vpop.permute.xlu0 %811
    %v814 = vmul.f32 %v804, %v812
    %816 = vrot.lane.b32.xlu0 %v814, 32
    %v817 = vpop.permute.xlu0 %816
    %v819 = vadd.f32 %v809, %v817
    %v820 = vtanh.pop %v819
    %822 = vrot.lane.b32.xlu0 %v820, 32
    %v823 = vpop.permute.xlu0 %822
    %v825 = vmul.f32 %v804, %v823
    %827 = vrot.lane.b32.xlu0 %v825, 64
    %v828 = vpop.permute.xlu0 %827
    %vm830 = vcmask 259077
    %831 = vst.msk [vmem:[#allocation2] sm:$0x20] %vm830, %v828
    %v832 = vld [vmem:[#allocation2] sm:$0x3f]
    %v833 = vld [vmem:[%s13] sm:$0xff]
    %v834 = vld [vmem:[%s13 + $0x8] sm:$0xff]
    %v835 = vld [vmem:[%s13 + $0x10] sm:$0xff]
    %v836 = vld [vmem:[%s13 + $0x18] sm:$0xff]
    %v837 = vld [vmem:[%s14] sm:$0x1]
    %v839 = vperm.slane %v837, 0
    %v842 = vsel %vm477, %v832, 0
    %844 = vmatpush.msra.mxu0 0.0
    %845 = vmatpush.msra.mxu0 0.0
    %846 = vmatpush.msra.mxu0 0.0
    %847 = vmatpush.msra.mxu0 0.0
    %848 = vmatpush.msra.mxu0 0.0
    %849 = vmatpush.msra.mxu0 0.0
    %850 = vmatpush.msra.mxu0 0.0
    %851 = vmatpush.msra.mxu0 0.0
    %852 = vmatpush.msra.mxu0 0.0
    %853 = vmatpush.msra.mxu0 0.0
    %854 = vmatpush.msra.mxu0 0.0
    %855 = vmatpush.msra.mxu0 0.0
    %856 = vmatpush.msra.mxu0 %v836
    %857 = vmatpush.msra.mxu0 %v835
    %858 = vmatpush.msra.mxu0 %v834
    %859 = vmatpush.msra.mxu0 %v833
    %860 = vmatmul.f32.gmra.mxu0 %v842
    %v861 = vpop.f32.mrf.mxu0
    %v862 = vadd.f32 %v839, %v861
    %863 = vdwg.mxu0
    %vm864 = vcmask 46080
    %v865 = vsel %vm864, %v862, -inf
    %866 = vmax.xlane.f32.xlu0 %v865
    %v867 = vpop.xlane.xlu0 %866
    %v868 = vsub.f32 %v862, %v867
    %v869 = vmul.f32 %v868, 1.442695
    %v870 = vpow.pop %v869
    %v871 = vsel %vm864, %v870, 0.0
    %872 = vadd.xlane.f32.xlu0 %v871
    %v873 = vpop.xlane.xlu0 %872
    %v874 = vlog2.pop %v873
    %v875 = vmul.f32 %v874, 0.6931472
    %v876 = vsub.f32 %v868, %v875
    %877 = vst.msk [vmem:[#allocation11] sm:$0x3f] %vm864, %v876
    // Predicated region
    $region78: #{tpu_custom_call.1} parent=1 // pred_check
      _
    $region79: #{tpu_custom_call.1} parent=1 // pred_check_branch
      %879 = sbr.rel (0) target = $region81
    $region80: #{tpu_custom_call.1} parent=1 // pred_region
      %881 = vsyncadd [#allocation5], 0
      %s883 = sshll.u32 [#allocation11], 4
      %s884 = int_to_ptr.vmem [resolvable:$true] %s883
      %s885 = sshll.u32 %s15, 4
      %s886 = int_to_ptr.hbm [resolvable:$true] %s885
      %888 = dma.vmem_to_hbm [thread:$0]  %s884, 128, %s886, [#allocation5]
    $region81: #{tpu_custom_call.1} parent=1 // pred_fallthru
      _
    // Predicated region
    $region82: #{tpu_custom_call.1} parent=1 // pred_check
      _
    $region83: #{tpu_custom_call.1} parent=1 // pred_check_branch
      %890 = sbr.rel (0) target = $region85
    $region84: #{tpu_custom_call.1} parent=1 // pred_region
      %892 = dma.done [#allocation5], 128
    $region85: #{tpu_custom_call.1} parent=1 // pred_fallthru
      _
    %893 = vsyncpa [#allocation4], 1
    %894 = vsyncpa [#allocation7], 1
    %895 = vsyncpa [#allocation10], 1
    %896 = vsyncpa [#allocation5], 1

</llo_original>
